<compile_context>
chip_gen: v7x
topology: tpu7x:2x2x1
jax: 0.10.0
libtpu: 0.0.40
codegen_flags: <defaults>
</compile_context>

<pallas_src>
import functools
import math

import jax
import jax.numpy as jnp
from jax.experimental import pallas as pl
from jax.experimental.pallas import tpu as pltpu


# ----------------------------------------------------------------------------
# Fused Pallas kernel: all TransformerConv layers + ReLU/LayerNorm epilogues
# + MLP head + final [input_x | mlp_out] concat, in one body (layers unrolled
# at trace time; graph state stays in VMEM/vregs across layers).
# ----------------------------------------------------------------------------
def gtn_fused_kernel(x_ref, mask_ref, ev_ref, w_ref, s_ref, o_ref, *,
                     num_layers: int, hidden_dim: int, input_dim: int,
                     mlp_out_dim: int):
    f32 = jnp.float32
    bf16 = jnp.bfloat16
    C = hidden_dim

    x_in = x_ref[...]                               # (N, Dmax) f32 (zero-padded cols)
    mask = mask_ref[...].astype(f32)                # (N, N) exact 0/1
    ev = ev_ref[...]                                # (N, N) scalar edge attr
    edge_present = mask > 0
    neg_inf = f32(-1e30)

    x = x_in
    for li in range(num_layers):
        w = w_ref[li]                               # (Dmax, Wpad) bf16
        if x.shape[-1] != w.shape[0]:
            w = w[: x.shape[-1], :]
        b = s_ref[2 * li:2 * li + 1, :]             # (1, Wpad) fused bias row
        small = s_ref[2 * li + 1:2 * li + 2, :]     # (1, Wpad): [we|wb02|ln_g|ln_b]
        we = small[:, 0:C]
        wb02 = small[:, C:2 * C]

        # Fused projection: [q/sqrt(C) | k | v | skip | q.we | x_r.(wb1-wb2)]
        proj = jnp.dot(x.astype(bf16), w, preferred_element_type=f32) + b
        q = proj[:, 0:C]                            # already scaled by 1/sqrt(C)
        k = proj[:, C:2 * C]
        v = proj[:, 2 * C:3 * C]
        x_r = proj[:, 3 * C:4 * C]
        qe = proj[:, 4 * C:4 * C + 1]               # (N,1) q_i . lin_edge weight
        xrb = proj[:, 4 * C + 1:4 * C + 2]          # (N,1) x_r half of beta logit

        # score[i,j] = q_i . k_j + (q_i . we) * ev[i,j]   (scale folded into q)
        qk = jax.lax.dot_general(
            q.astype(bf16), k.astype(bf16),
            dimension_numbers=(((1,), (1,)), ((), ())),
            preferred_element_type=f32)             # (N, N), no explicit k^T
        scores = jnp.where(edge_present, qk + qe * ev, neg_inf)

        # Masked softmax over source nodes j (rows with no edges -> alpha = 0).
        m = jnp.max(scores, axis=-1, keepdims=True)
        p = jnp.exp(scores - m) * mask
        s = jnp.sum(p, axis=-1, keepdims=True)
        alpha = p * pl.reciprocal(jnp.where(s > 0, s, 1.0), approx=True)

        # out_i = sum_j alpha_ij * (v_j + ev_ij * we)
        out = jnp.dot(alpha.astype(bf16), v.astype(bf16),
                      preferred_element_type=f32)
        ae = jnp.sum(alpha * ev, axis=-1, keepdims=True)
        out = out + ae * we

        # beta-gated skip: beta = sigmoid(lin_beta([out, x_r, out - x_r]))
        beta = jax.nn.sigmoid(
            jnp.sum(out * wb02, axis=-1, keepdims=True) + xrb)
        out = beta * x_r + (1.0 - beta) * out

        if li < num_layers - 1:
            g = small[:, 2 * C:3 * C]
            bln = small[:, 3 * C:4 * C]
            out = jnp.maximum(out, 0.0)             # ReLU
            mu = jnp.mean(out, axis=-1, keepdims=True)
            var = jnp.mean((out - mu) * (out - mu), axis=-1, keepdims=True)
            out = (out - mu) * jax.lax.rsqrt(var + 1e-5)
            out = out * g + bln
            # TODO(synk): F.dropout is a no-op here (inference / training=False).
        x = out

    # MLP head + fused torch.cat([input_x, mlp(x)], dim=-1).
    mw = w_ref[num_layers]
    if x.shape[-1] != mw.shape[0]:
        mw = mw[: x.shape[-1], :]
    mb = s_ref[2 * num_layers:2 * num_layers + 1, 0:mlp_out_dim]
    y = jnp.dot(x.astype(bf16), mw,
                preferred_element_type=f32)[:, 0:mlp_out_dim] + mb
    o_ref[:, 0:input_dim] = x_in[:, 0:input_dim].astype(o_ref.dtype)
    o_ref[:, input_dim:input_dim + mlp_out_dim] = y.astype(o_ref.dtype)


# ----------------------------------------------------------------------------
# Wrapper (grid=(1,), full-array blocks — shapes are tiny; everything fits VMEM)
# ----------------------------------------------------------------------------
def _full_block(shape):
    nd = len(shape)
    return pl.BlockSpec(shape, lambda i, _nd=nd: (0,) * _nd)


def gtn_forward(x, edge_index, edge_attr, packed, *, num_layers, hidden_dim,
                mlp_out_dim):
    n, input_dim = x.shape
    w_all, slab = packed["w_all"], packed["slab"]
    _, dmax, _ = w_all.shape

    src, dst = edge_index[0], edge_index[1]
    # Dense (target, source) adjacency mask (bf16, exact 0/1) and edge values,
    # built directly in their final dtypes (no extra f32 intermediate).
    # NOTE: assumes deduplicated edge_index (duplicate parallel edges would be
    # overwritten instead of softmaxed separately as PyG would).
    # NOTE(vmem): dense (N,N) mask/ev is fine at small N; at large N raise
    # vmem_limit_bytes and tile over source blocks (v5e scoped default 16 MiB,
    # v7x physical VMEM 64 MiB).
    e = src.shape[0]
    mask = jnp.zeros((n, n), jnp.bfloat16).at[dst, src].set(
        jnp.ones((e,), jnp.bfloat16))
    ev = jnp.zeros((n, n), jnp.float32).at[dst, src].set(edge_attr[:, 0])

    # Keep x in f32 so the fused [input_x | mlp(x)] passthrough stays exact.
    x_pad = jnp.pad(x, ((0, 0), (0, dmax - input_dim))) if dmax > input_dim else x

    inputs = [x_pad, mask, ev, w_all, slab]
    kern = functools.partial(
        gtn_fused_kernel, num_layers=num_layers, hidden_dim=hidden_dim,
        input_dim=input_dim, mlp_out_dim=mlp_out_dim)
    out_dim = input_dim + mlp_out_dim
    return pl.pallas_call(
        kern,
        out_shape=jax.ShapeDtypeStruct((n, out_dim), jnp.float32),
        grid=(1,),
        in_specs=[_full_block(a.shape) for a in inputs],
        out_specs=pl.BlockSpec((n, out_dim), lambda i: (0, 0)),
        compiler_params=pltpu.CompilerParams(
            dimension_semantics=("arbitrary",)),
    )(*inputs)


# ----------------------------------------------------------------------------
# Deterministic parameter construction + one-time packing transform
# ----------------------------------------------------------------------------
def make_params(key, input_dim, hidden_dim, output_dim, num_layers):
    def glorot(k, shape):
        fan_in, fan_out = shape[0], shape[-1]
        std = math.sqrt(2.0 / (fan_in + fan_out))
        return jax.random.normal(k, shape, jnp.float32) * std

    convs = []
    in_dims = [input_dim] + [hidden_dim] * (num_layers - 1)
    for li in range(num_layers):
        din, c = in_dims[li], hidden_dim
        key, *ks = jax.random.split(key, 8)
        convs.append(dict(
            wq=glorot(ks[0], (din, c)), bq=jnp.zeros((1, c), jnp.float32),
            wk=glorot(ks[1], (din, c)), bk=jnp.zeros((1, c), jnp.float32),
            wv=glorot(ks[2], (din, c)), bv=jnp.zeros((1, c), jnp.float32),
            we=glorot(ks[3], (1, c)),                       # lin_edge (no bias)
            ws=glorot(ks[4], (din, c)), bs=jnp.zeros((1, c), jnp.float32),
            wb=glorot(ks[5], (3, c)),                       # lin_beta (no bias)
            ln_g=jnp.ones((1, c), jnp.float32),             # LayerNorm gamma
            ln_b=jnp.zeros((1, c), jnp.float32),            # LayerNorm beta
        ))
    key, km = jax.random.split(key)
    return dict(
        convs=convs,
        mlp_w=glorot(km, (hidden_dim, output_dim - input_dim)),
        mlp_b=jnp.zeros((1, output_dim - input_dim), jnp.float32),
    )


def pack_params(params):
    """Numerically-equivalent re-layout into two slabs (one bf16, one f32).

    Per conv layer the projection weight is (Dmax, Wpad) bf16 with columns
      [ wq/sqrt(C) | wk | wv | ws | wq_s @ we^T | ws @ (wb1-wb2)^T | 0... ]
    so q.we (edge-score term) and the x_r half of the beta logit fall out of
    the single MXU pass.  All layer weights + the MLP weight are stacked into
    one (L+1, Dmax, Wpad) array.  Small params live in one (2L+1, Wpad) f32
    slab:
      row 2l   : [ bq_s | 0 | bv | bs | bq_s.we | bs.wb12 | 0... ]
      row 2l+1 : [ we | wb0+wb2 | ln_gamma | ln_beta | 0... ]
      row 2L   : [ mlp_b | 0... ]
    (bk is dropped: it shifts every score in a row equally -> softmax-invariant.)
    """
    convs = params["convs"]
    num_layers = len(convs)
    C = convs[0]["wq"].shape[1]
    input_dim = convs[0]["wq"].shape[0]
    dmax = max(input_dim, C)
    dout = params["mlp_w"].shape[1]
    cols = 4 * C + 2
    wpad = ((max(cols, 4 * C, dout) + 127) // 128) * 128
    inv_sqrt_c = 1.0 / math.sqrt(float(C))

    w_all = jnp.zeros((num_layers + 1, dmax, wpad), jnp.float32)
    slab = jnp.zeros((2 * num_layers + 1, wpad), jnp.float32)

    for li, p in enumerate(convs):
        din = p["wq"].shape[0]
        wq_s = p["wq"] * inv_sqrt_c
        bq_s = p["bq"] * inv_sqrt_c
        we = p["we"]                                    # (1, C)
        wb02 = p["wb"][0] + p["wb"][2]                  # (C,)
        wb12 = p["wb"][1] - p["wb"][2]                  # (C,)
        qe_col = wq_s @ we.T                            # (din, 1)
        xrb_col = p["ws"] @ wb12[:, None]               # (din, 1)
        wcat = jnp.concatenate(
            [wq_s, p["wk"], p["wv"], p["ws"], qe_col, xrb_col], axis=1)
        w_all = w_all.at[li, :din, :cols].set(wcat)

        b_qe = jnp.sum(bq_s * we)
        b_xrb = jnp.sum(p["bs"][0] * wb12)
        brow = jnp.concatenate(
            [bq_s, jnp.zeros_like(p["bk"]), p["bv"], p["bs"],
             jnp.stack([b_qe, b_xrb])[None, :]], axis=1)    # (1, 4C+2)
        slab = slab.at[2 * li, :cols].set(brow[0])
        srow = jnp.concatenate([we[0], wb02, p["ln_g"][0], p["ln_b"][0]])
        slab = slab.at[2 * li + 1, :4 * C].set(srow)

    w_all = w_all.at[num_layers, :C, :dout].set(params["mlp_w"])
    slab = slab.at[2 * num_layers, :dout].set(params["mlp_b"][0])

    return dict(w_all=w_all.astype(jnp.bfloat16), slab=slab)


# ----------------------------------------------------------------------------
# Pure-JAX f32 reference (same dense-graph semantics) to validate packing math.
# ----------------------------------------------------------------------------
def gtn_reference(x, edge_index, edge_attr, params, *, num_layers):
    n = x.shape[0]
    src, dst = edge_index[0], edge_index[1]
    mask = jnp.zeros((n, n), jnp.float32).at[dst, src].set(1.0)
    ev = jnp.zeros((n, n), jnp.float32).at[dst, src].set(edge_attr[:, 0])
    convs = params["convs"]
    C = convs[0]["wq"].shape[1]
    scale = 1.0 / math.sqrt(float(C))
    h = x
    for li in range(num_layers):
        p = convs[li]
        q = h @ p["wq"] + p["bq"]
        k = h @ p["wk"] + p["bk"]
        v = h @ p["wv"] + p["bv"]
        x_r = h @ p["ws"] + p["bs"]
        we = p["we"]
        scores = (q @ k.T + (q @ we.T) * ev) * scale
        scores = jnp.where(mask > 0, scores, -1e30)
        m = jnp.max(scores, axis=-1, keepdims=True)
        pexp = jnp.exp(scores - m) * mask
        s = jnp.sum(pexp, axis=-1, keepdims=True)
        alpha = pexp / jnp.where(s > 0, s, 1.0)
        out = alpha @ v + jnp.sum(alpha * ev, axis=-1, keepdims=True) * we
        wb = p["wb"]
        logit = jnp.sum(out * wb[0] + x_r * wb[1] + (out - x_r) * wb[2],
                        axis=-1, keepdims=True)
        beta = jax.nn.sigmoid(logit)
        out = beta * x_r + (1.0 - beta) * out
        if li < num_layers - 1:
            out = jnp.maximum(out, 0.0)
            mu = jnp.mean(out, axis=-1, keepdims=True)
            var = jnp.mean((out - mu) ** 2, axis=-1, keepdims=True)
            out = (out - mu) / jnp.sqrt(var + 1e-5)
            out = out * p["ln_g"] + p["ln_b"]
        h = out
    y = h @ params["mlp_w"] + params["mlp_b"]
    return jnp.concatenate([x, y], axis=-1)


# ----------------------------------------------------------------------------
if __name__ == "__main__":
    INPUT_DIM, HIDDEN_DIM, OUTPUT_DIM = 8, 32, 16
    NUM_LAYERS = 3
    N = 16  # nodes

    key = jax.random.PRNGKey(0)
    kx, ke, kp = jax.random.split(key, 3)

    x = jax.random.normal(kx, (N, INPUT_DIM), jnp.float32)

    # Deterministic unique edges: j -> (j + k) % N for k in {1, 2, 5}.
    src = jnp.concatenate([jnp.arange(N, dtype=jnp.int32)] * 3)
    dst = jnp.concatenate([(jnp.arange(N, dtype=jnp.int32) + k) % N
                           for k in (1, 2, 5)])
    edge_index = jnp.stack([src, dst], axis=0)              # (2, E)
    edge_attr = jax.random.normal(ke, (edge_index.shape[1], 1), jnp.float32)

    raw_params = make_params(kp, INPUT_DIM, HIDDEN_DIM, OUTPUT_DIM, NUM_LAYERS)
    packed = pack_params(raw_params)

    fwd = jax.jit(functools.partial(
        gtn_forward, num_layers=NUM_LAYERS, hidden_dim=HIDDEN_DIM,
        mlp_out_dim=OUTPUT_DIM - INPUT_DIM))
    out = jax.block_until_ready(fwd(x, edge_index, edge_attr, packed))

    assert out.shape == (N, OUTPUT_DIM), out.shape
    assert bool(jnp.all(jnp.isfinite(out)))

    # Correctness vs. pure-JAX f32 reference; tolerance covers the bf16 MXU
    # passes and the approximate softmax reciprocal.
    ref = gtn_reference(x, edge_index, edge_attr, raw_params,
                        num_layers=NUM_LAYERS)
    max_err = float(jnp.max(jnp.abs(out - ref)))
    assert max_err < 0.25, max_err

    print("KERNEL_OK")
</pallas_src>

<mosaic_0001>
module attributes {stable_mosaic.version = 11 : i64} {
  func.func @gtn_fused_kernel(%arg0: i32, %arg1: memref<16x32xf32, #tpu.memory_space<vmem>>, %arg2: memref<16x16xbf16, #tpu.memory_space<vmem>>, %arg3: memref<16x16xf32, #tpu.memory_space<vmem>>, %arg4: memref<4x32x256xbf16, #tpu.memory_space<vmem>>, %arg5: memref<7x256xf32, #tpu.memory_space<vmem>>, %arg6: memref<16x16xf32, #tpu.memory_space<vmem>>) attributes {dimension_semantics = [#tpu.dimension_semantics<arbitrary>], iteration_bounds = array<i64: 1>, scalar_prefetch = 0 : i64, scratch_operands = 0 : i64, tpu.core_type = #tpu.core_type<tc>, window_params = [{pipeline_mode = #tpu.pipeline_mode<synchronous>, transform_indices = @transform_0, window_bounds = array<i64: 16, 32>}, {pipeline_mode = #tpu.pipeline_mode<synchronous>, transform_indices = @transform_1, window_bounds = array<i64: 16, 16>}, {pipeline_mode = #tpu.pipeline_mode<synchronous>, transform_indices = @transform_2, window_bounds = array<i64: 16, 16>}, {pipeline_mode = #tpu.pipeline_mode<synchronous>, transform_indices = @transform_3, window_bounds = array<i64: 4, 32, 256>}, {pipeline_mode = #tpu.pipeline_mode<synchronous>, transform_indices = @transform_4, window_bounds = array<i64: 7, 256>}, {pipeline_mode = #tpu.pipeline_mode<synchronous>, transform_indices = @transform_5, window_bounds = array<i64: 16, 16>}]} {
    %c0 = arith.constant 0 : index
    %c0_0 = arith.constant 0 : index
    %0 = vector.load %arg1[%c0, %c0_0] : memref<16x32xf32, #tpu.memory_space<vmem>>, vector<16x32xf32>
    %c0_1 = arith.constant 0 : index
    %c0_2 = arith.constant 0 : index
    %1 = vector.load %arg2[%c0_1, %c0_2] : memref<16x16xbf16, #tpu.memory_space<vmem>>, vector<16x16xbf16>
    %2 = arith.extf %1 : vector<16x16xbf16> to vector<16x16xf32>
    %c0_3 = arith.constant 0 : index
    %c0_4 = arith.constant 0 : index
    %3 = vector.load %arg3[%c0_3, %c0_4] : memref<16x16xf32, #tpu.memory_space<vmem>>, vector<16x16xf32>
    %cst = arith.constant 0.000000e+00 : f32
    %4 = vector.broadcast %cst : f32 to vector<16x16xf32>
    %5 = arith.cmpf ogt, %2, %4 : vector<16x16xf32>
    %c0_5 = arith.constant 0 : index
    %c0_6 = arith.constant 0 : index
    %c0_7 = arith.constant 0 : index
    %6 = vector.load %arg4[%c0_5, %c0_6, %c0_7] : memref<4x32x256xbf16, #tpu.memory_space<vmem>>, vector<1x32x256xbf16>
    %7 = vector.shape_cast %6 : vector<1x32x256xbf16> to vector<32x256xbf16>
    %c0_8 = arith.constant 0 : index
    %c0_9 = arith.constant 0 : index
    %8 = vector.load %arg5[%c0_8, %c0_9] : memref<7x256xf32, #tpu.memory_space<vmem>>, vector<1x256xf32>
    %c1 = arith.constant 1 : index
    %c0_10 = arith.constant 0 : index
    %9 = vector.load %arg5[%c1, %c0_10] : memref<7x256xf32, #tpu.memory_space<vmem>>, vector<1x256xf32>
    %10 = vector.extract_strided_slice %9 {offsets = [0, 0], sizes = [1, 32], strides = [1, 1]} : vector<1x256xf32> to vector<1x32xf32>
    %11 = vector.extract_strided_slice %9 {offsets = [0, 32], sizes = [1, 32], strides = [1, 1]} : vector<1x256xf32> to vector<1x32xf32>
    %12 = arith.truncf %0 : vector<16x32xf32> to vector<16x32xbf16>
    %cst_11 = arith.constant dense<0.000000e+00> : vector<16x256xf32>
    %13 = tpu.matmul %12, %7, %cst_11 {dimension_numbers = #tpu.dot_dimension_numbers<[1], [0], [0], [1], [0, 0, 1, 1], [], []>} : vector<16x32xbf16>, vector<32x256xbf16>, vector<16x256xf32> -> vector<16x256xf32>
    %14 = vector.broadcast %8 : vector<1x256xf32> to vector<16x256xf32>
    %15 = arith.addf %13, %14 : vector<16x256xf32>
    %16 = vector.extract_strided_slice %15 {offsets = [0, 0], sizes = [16, 32], strides = [1, 1]} : vector<16x256xf32> to vector<16x32xf32>
    %17 = vector.extract_strided_slice %15 {offsets = [0, 32], sizes = [16, 32], strides = [1, 1]} : vector<16x256xf32> to vector<16x32xf32>
    %18 = vector.extract_strided_slice %15 {offsets = [0, 64], sizes = [16, 32], strides = [1, 1]} : vector<16x256xf32> to vector<16x32xf32>
    %19 = vector.extract_strided_slice %15 {offsets = [0, 96], sizes = [16, 32], strides = [1, 1]} : vector<16x256xf32> to vector<16x32xf32>
    %20 = vector.extract_strided_slice %15 {offsets = [0, 128], sizes = [16, 1], strides = [1, 1]} : vector<16x256xf32> to vector<16x1xf32>
    %21 = vector.extract_strided_slice %15 {offsets = [0, 129], sizes = [16, 1], strides = [1, 1]} : vector<16x256xf32> to vector<16x1xf32>
    %22 = arith.truncf %16 : vector<16x32xf32> to vector<16x32xbf16>
    %23 = arith.truncf %17 : vector<16x32xf32> to vector<16x32xbf16>
    %cst_12 = arith.constant dense<0.000000e+00> : vector<16x16xf32>
    %24 = tpu.matmul %22, %23, %cst_12 {dimension_numbers = #tpu.dot_dimension_numbers<[1], [1], [0], [0], [0, 0, 1, 0], [], []>} : vector<16x32xbf16>, vector<16x32xbf16>, vector<16x16xf32> -> vector<16x16xf32>
    %25 = vector.broadcast %20 : vector<16x1xf32> to vector<16x16xf32>
    %26 = arith.mulf %25, %3 : vector<16x16xf32>
    %27 = arith.addf %24, %26 : vector<16x16xf32>
    %cst_13 = arith.constant -1.000000e+30 : f32
    %28 = vector.broadcast %cst_13 : f32 to vector<16x16xf32>
    %29 = arith.select %5, %27, %28 : vector<16x16xi1>, vector<16x16xf32>
    %cst_14 = arith.constant dense<0xFF800000> : vector<16xf32>
    %30 = vector.multi_reduction <maximumf>, %29, %cst_14 [1] : vector<16x16xf32> to vector<16xf32>
    %31 = vector.shape_cast %30 : vector<16xf32> to vector<16x1xf32>
    %32 = vector.broadcast %31 : vector<16x1xf32> to vector<16x16xf32>
    %33 = arith.subf %29, %32 : vector<16x16xf32>
    %34 = math.exp %33 : vector<16x16xf32>
    %35 = arith.mulf %34, %2 : vector<16x16xf32>
    %cst_15 = arith.constant dense<0.000000e+00> : vector<16xf32>
    %36 = vector.multi_reduction <add>, %35, %cst_15 [1] : vector<16x16xf32> to vector<16xf32>
    %37 = vector.shape_cast %36 : vector<16xf32> to vector<16x1xf32>
    %cst_16 = arith.constant 0.000000e+00 : f32
    %38 = vector.broadcast %cst_16 : f32 to vector<16x1xf32>
    %39 = arith.cmpf ogt, %37, %38 : vector<16x1xf32>
    %cst_17 = arith.constant 1.000000e+00 : f32
    %40 = vector.broadcast %cst_17 : f32 to vector<16x1xf32>
    %41 = arith.select %39, %37, %40 : vector<16x1xi1>, vector<16x1xf32>
    %42 = tpu.reciprocal %41 {approx = true} : vector<16x1xf32> -> vector<16x1xf32>
    %43 = vector.broadcast %42 : vector<16x1xf32> to vector<16x16xf32>
    %44 = arith.mulf %35, %43 : vector<16x16xf32>
    %45 = arith.truncf %44 : vector<16x16xf32> to vector<16x16xbf16>
    %46 = arith.truncf %18 : vector<16x32xf32> to vector<16x32xbf16>
    %cst_18 = arith.constant dense<0.000000e+00> : vector<16x32xf32>
    %47 = tpu.matmul %45, %46, %cst_18 {dimension_numbers = #tpu.dot_dimension_numbers<[1], [0], [0], [1], [0, 0, 1, 1], [], []>} : vector<16x16xbf16>, vector<16x32xbf16>, vector<16x32xf32> -> vector<16x32xf32>
    %48 = arith.mulf %44, %3 : vector<16x16xf32>
    %cst_19 = arith.constant dense<0.000000e+00> : vector<16xf32>
    %49 = vector.multi_reduction <add>, %48, %cst_19 [1] : vector<16x16xf32> to vector<16xf32>
    %50 = vector.shape_cast %49 : vector<16xf32> to vector<16x1xf32>
    %51 = vector.broadcast %50 : vector<16x1xf32> to vector<16x32xf32>
    %52 = vector.broadcast %10 : vector<1x32xf32> to vector<16x32xf32>
    %53 = arith.mulf %51, %52 : vector<16x32xf32>
    %54 = arith.addf %47, %53 : vector<16x32xf32>
    %55 = vector.broadcast %11 : vector<1x32xf32> to vector<16x32xf32>
    %56 = arith.mulf %54, %55 : vector<16x32xf32>
    %cst_20 = arith.constant dense<0.000000e+00> : vector<16xf32>
    %57 = vector.multi_reduction <add>, %56, %cst_20 [1] : vector<16x32xf32> to vector<16xf32>
    %58 = vector.shape_cast %57 : vector<16xf32> to vector<16x1xf32>
    %59 = arith.addf %58, %21 : vector<16x1xf32>
    %60 = arith.negf %59 : vector<16x1xf32>
    %61 = math.exp %60 : vector<16x1xf32>
    %cst_21 = arith.constant 1.000000e+00 : f32
    %62 = vector.broadcast %cst_21 : f32 to vector<16x1xf32>
    %63 = arith.addf %62, %61 : vector<16x1xf32>
    %64 = arith.divf %62, %63 : vector<16x1xf32>
    %65 = vector.broadcast %64 : vector<16x1xf32> to vector<16x32xf32>
    %66 = arith.mulf %65, %19 : vector<16x32xf32>
    %cst_22 = arith.constant 1.000000e+00 : f32
    %67 = vector.broadcast %cst_22 : f32 to vector<16x1xf32>
    %68 = arith.subf %67, %64 : vector<16x1xf32>
    %69 = vector.broadcast %68 : vector<16x1xf32> to vector<16x32xf32>
    %70 = arith.mulf %69, %54 : vector<16x32xf32>
    %71 = arith.addf %66, %70 : vector<16x32xf32>
    %72 = vector.extract_strided_slice %9 {offsets = [0, 64], sizes = [1, 32], strides = [1, 1]} : vector<1x256xf32> to vector<1x32xf32>
    %73 = vector.extract_strided_slice %9 {offsets = [0, 96], sizes = [1, 32], strides = [1, 1]} : vector<1x256xf32> to vector<1x32xf32>
    %cst_23 = arith.constant 0.000000e+00 : f32
    %74 = vector.broadcast %cst_23 : f32 to vector<16x32xf32>
    %75 = arith.maximumf %71, %74 : vector<16x32xf32>
    %cst_24 = arith.constant dense<0.000000e+00> : vector<16xf32>
    %76 = vector.multi_reduction <add>, %75, %cst_24 [1] : vector<16x32xf32> to vector<16xf32>
    %77 = vector.shape_cast %76 : vector<16xf32> to vector<16x1xf32>
    %cst_25 = arith.constant 3.200000e+01 : f32
    %78 = vector.broadcast %cst_25 : f32 to vector<16x1xf32>
    %79 = arith.divf %77, %78 : vector<16x1xf32>
    %80 = vector.broadcast %79 : vector<16x1xf32> to vector<16x32xf32>
    %81 = arith.subf %75, %80 : vector<16x32xf32>
    %82 = vector.broadcast %79 : vector<16x1xf32> to vector<16x32xf32>
    %83 = arith.subf %75, %82 : vector<16x32xf32>
    %84 = arith.mulf %81, %83 : vector<16x32xf32>
    %cst_26 = arith.constant dense<0.000000e+00> : vector<16xf32>
    %85 = vector.multi_reduction <add>, %84, %cst_26 [1] : vector<16x32xf32> to vector<16xf32>
    %86 = vector.shape_cast %85 : vector<16xf32> to vector<16x1xf32>
    %cst_27 = arith.constant 3.200000e+01 : f32
    %87 = vector.broadcast %cst_27 : f32 to vector<16x1xf32>
    %88 = arith.divf %86, %87 : vector<16x1xf32>
    %89 = vector.broadcast %79 : vector<16x1xf32> to vector<16x32xf32>
    %90 = arith.subf %75, %89 : vector<16x32xf32>
    %cst_28 = arith.constant 9.99999974E-6 : f32
    %91 = vector.broadcast %cst_28 : f32 to vector<16x1xf32>
    %92 = arith.addf %88, %91 : vector<16x1xf32>
    %93 = math.rsqrt %92 : vector<16x1xf32>
    %94 = vector.broadcast %93 : vector<16x1xf32> to vector<16x32xf32>
    %95 = arith.mulf %90, %94 : vector<16x32xf32>
    %96 = vector.broadcast %72 : vector<1x32xf32> to vector<16x32xf32>
    %97 = arith.mulf %95, %96 : vector<16x32xf32>
    %98 = vector.broadcast %73 : vector<1x32xf32> to vector<16x32xf32>
    %99 = arith.addf %97, %98 : vector<16x32xf32>
    %c1_29 = arith.constant 1 : index
    %c0_30 = arith.constant 0 : index
    %c0_31 = arith.constant 0 : index
    %100 = vector.load %arg4[%c1_29, %c0_30, %c0_31] : memref<4x32x256xbf16, #tpu.memory_space<vmem>>, vector<1x32x256xbf16>
    %101 = vector.shape_cast %100 : vector<1x32x256xbf16> to vector<32x256xbf16>
    %c2 = arith.constant 2 : index
    %c0_32 = arith.constant 0 : index
    %102 = vector.load %arg5[%c2, %c0_32] : memref<7x256xf32, #tpu.memory_space<vmem>>, vector<1x256xf32>
    %c3 = arith.constant 3 : index
    %c0_33 = arith.constant 0 : index
    %103 = vector.load %arg5[%c3, %c0_33] : memref<7x256xf32, #tpu.memory_space<vmem>>, vector<1x256xf32>
    %104 = vector.extract_strided_slice %103 {offsets = [0, 0], sizes = [1, 32], strides = [1, 1]} : vector<1x256xf32> to vector<1x32xf32>
    %105 = vector.extract_strided_slice %103 {offsets = [0, 32], sizes = [1, 32], strides = [1, 1]} : vector<1x256xf32> to vector<1x32xf32>
    %106 = arith.truncf %99 : vector<16x32xf32> to vector<16x32xbf16>
    %cst_34 = arith.constant dense<0.000000e+00> : vector<16x256xf32>
    %107 = tpu.matmul %106, %101, %cst_34 {dimension_numbers = #tpu.dot_dimension_numbers<[1], [0], [0], [1], [0, 0, 1, 1], [], []>} : vector<16x32xbf16>, vector<32x256xbf16>, vector<16x256xf32> -> vector<16x256xf32>
    %108 = vector.broadcast %102 : vector<1x256xf32> to vector<16x256xf32>
    %109 = arith.addf %107, %108 : vector<16x256xf32>
    %110 = vector.extract_strided_slice %109 {offsets = [0, 0], sizes = [16, 32], strides = [1, 1]} : vector<16x256xf32> to vector<16x32xf32>
    %111 = vector.extract_strided_slice %109 {offsets = [0, 32], sizes = [16, 32], strides = [1, 1]} : vector<16x256xf32> to vector<16x32xf32>
    %112 = vector.extract_strided_slice %109 {offsets = [0, 64], sizes = [16, 32], strides = [1, 1]} : vector<16x256xf32> to vector<16x32xf32>
    %113 = vector.extract_strided_slice %109 {offsets = [0, 96], sizes = [16, 32], strides = [1, 1]} : vector<16x256xf32> to vector<16x32xf32>
    %114 = vector.extract_strided_slice %109 {offsets = [0, 128], sizes = [16, 1], strides = [1, 1]} : vector<16x256xf32> to vector<16x1xf32>
    %115 = vector.extract_strided_slice %109 {offsets = [0, 129], sizes = [16, 1], strides = [1, 1]} : vector<16x256xf32> to vector<16x1xf32>
    %116 = arith.truncf %110 : vector<16x32xf32> to vector<16x32xbf16>
    %117 = arith.truncf %111 : vector<16x32xf32> to vector<16x32xbf16>
    %cst_35 = arith.constant dense<0.000000e+00> : vector<16x16xf32>
    %118 = tpu.matmul %116, %117, %cst_35 {dimension_numbers = #tpu.dot_dimension_numbers<[1], [1], [0], [0], [0, 0, 1, 0], [], []>} : vector<16x32xbf16>, vector<16x32xbf16>, vector<16x16xf32> -> vector<16x16xf32>
    %119 = vector.broadcast %114 : vector<16x1xf32> to vector<16x16xf32>
    %120 = arith.mulf %119, %3 : vector<16x16xf32>
    %121 = arith.addf %118, %120 : vector<16x16xf32>
    %cst_36 = arith.constant -1.000000e+30 : f32
    %122 = vector.broadcast %cst_36 : f32 to vector<16x16xf32>
    %123 = arith.select %5, %121, %122 : vector<16x16xi1>, vector<16x16xf32>
    %cst_37 = arith.constant dense<0xFF800000> : vector<16xf32>
    %124 = vector.multi_reduction <maximumf>, %123, %cst_37 [1] : vector<16x16xf32> to vector<16xf32>
    %125 = vector.shape_cast %124 : vector<16xf32> to vector<16x1xf32>
    %126 = vector.broadcast %125 : vector<16x1xf32> to vector<16x16xf32>
    %127 = arith.subf %123, %126 : vector<16x16xf32>
    %128 = math.exp %127 : vector<16x16xf32>
    %129 = arith.mulf %128, %2 : vector<16x16xf32>
    %cst_38 = arith.constant dense<0.000000e+00> : vector<16xf32>
    %130 = vector.multi_reduction <add>, %129, %cst_38 [1] : vector<16x16xf32> to vector<16xf32>
    %131 = vector.shape_cast %130 : vector<16xf32> to vector<16x1xf32>
    %cst_39 = arith.constant 0.000000e+00 : f32
    %132 = vector.broadcast %cst_39 : f32 to vector<16x1xf32>
    %133 = arith.cmpf ogt, %131, %132 : vector<16x1xf32>
    %cst_40 = arith.constant 1.000000e+00 : f32
    %134 = vector.broadcast %cst_40 : f32 to vector<16x1xf32>
    %135 = arith.select %133, %131, %134 : vector<16x1xi1>, vector<16x1xf32>
    %136 = tpu.reciprocal %135 {approx = true} : vector<16x1xf32> -> vector<16x1xf32>
    %137 = vector.broadcast %136 : vector<16x1xf32> to vector<16x16xf32>
    %138 = arith.mulf %129, %137 : vector<16x16xf32>
    %139 = arith.truncf %138 : vector<16x16xf32> to vector<16x16xbf16>
    %140 = arith.truncf %112 : vector<16x32xf32> to vector<16x32xbf16>
    %cst_41 = arith.constant dense<0.000000e+00> : vector<16x32xf32>
    %141 = tpu.matmul %139, %140, %cst_41 {dimension_numbers = #tpu.dot_dimension_numbers<[1], [0], [0], [1], [0, 0, 1, 1], [], []>} : vector<16x16xbf16>, vector<16x32xbf16>, vector<16x32xf32> -> vector<16x32xf32>
    %142 = arith.mulf %138, %3 : vector<16x16xf32>
    %cst_42 = arith.constant dense<0.000000e+00> : vector<16xf32>
    %143 = vector.multi_reduction <add>, %142, %cst_42 [1] : vector<16x16xf32> to vector<16xf32>
    %144 = vector.shape_cast %143 : vector<16xf32> to vector<16x1xf32>
    %145 = vector.broadcast %144 : vector<16x1xf32> to vector<16x32xf32>
    %146 = vector.broadcast %104 : vector<1x32xf32> to vector<16x32xf32>
    %147 = arith.mulf %145, %146 : vector<16x32xf32>
    %148 = arith.addf %141, %147 : vector<16x32xf32>
    %149 = vector.broadcast %105 : vector<1x32xf32> to vector<16x32xf32>
    %150 = arith.mulf %148, %149 : vector<16x32xf32>
    %cst_43 = arith.constant dense<0.000000e+00> : vector<16xf32>
    %151 = vector.multi_reduction <add>, %150, %cst_43 [1] : vector<16x32xf32> to vector<16xf32>
    %152 = vector.shape_cast %151 : vector<16xf32> to vector<16x1xf32>
    %153 = arith.addf %152, %115 : vector<16x1xf32>
    %154 = arith.negf %153 : vector<16x1xf32>
    %155 = math.exp %154 : vector<16x1xf32>
    %cst_44 = arith.constant 1.000000e+00 : f32
    %156 = vector.broadcast %cst_44 : f32 to vector<16x1xf32>
    %157 = arith.addf %156, %155 : vector<16x1xf32>
    %158 = arith.divf %156, %157 : vector<16x1xf32>
    %159 = vector.broadcast %158 : vector<16x1xf32> to vector<16x32xf32>
    %160 = arith.mulf %159, %113 : vector<16x32xf32>
    %cst_45 = arith.constant 1.000000e+00 : f32
    %161 = vector.broadcast %cst_45 : f32 to vector<16x1xf32>
    %162 = arith.subf %161, %158 : vector<16x1xf32>
    %163 = vector.broadcast %162 : vector<16x1xf32> to vector<16x32xf32>
    %164 = arith.mulf %163, %148 : vector<16x32xf32>
    %165 = arith.addf %160, %164 : vector<16x32xf32>
    %166 = vector.extract_strided_slice %103 {offsets = [0, 64], sizes = [1, 32], strides = [1, 1]} : vector<1x256xf32> to vector<1x32xf32>
    %167 = vector.extract_strided_slice %103 {offsets = [0, 96], sizes = [1, 32], strides = [1, 1]} : vector<1x256xf32> to vector<1x32xf32>
    %cst_46 = arith.constant 0.000000e+00 : f32
    %168 = vector.broadcast %cst_46 : f32 to vector<16x32xf32>
    %169 = arith.maximumf %165, %168 : vector<16x32xf32>
    %cst_47 = arith.constant dense<0.000000e+00> : vector<16xf32>
    %170 = vector.multi_reduction <add>, %169, %cst_47 [1] : vector<16x32xf32> to vector<16xf32>
    %171 = vector.shape_cast %170 : vector<16xf32> to vector<16x1xf32>
    %cst_48 = arith.constant 3.200000e+01 : f32
    %172 = vector.broadcast %cst_48 : f32 to vector<16x1xf32>
    %173 = arith.divf %171, %172 : vector<16x1xf32>
    %174 = vector.broadcast %173 : vector<16x1xf32> to vector<16x32xf32>
    %175 = arith.subf %169, %174 : vector<16x32xf32>
    %176 = vector.broadcast %173 : vector<16x1xf32> to vector<16x32xf32>
    %177 = arith.subf %169, %176 : vector<16x32xf32>
    %178 = arith.mulf %175, %177 : vector<16x32xf32>
    %cst_49 = arith.constant dense<0.000000e+00> : vector<16xf32>
    %179 = vector.multi_reduction <add>, %178, %cst_49 [1] : vector<16x32xf32> to vector<16xf32>
    %180 = vector.shape_cast %179 : vector<16xf32> to vector<16x1xf32>
    %cst_50 = arith.constant 3.200000e+01 : f32
    %181 = vector.broadcast %cst_50 : f32 to vector<16x1xf32>
    %182 = arith.divf %180, %181 : vector<16x1xf32>
    %183 = vector.broadcast %173 : vector<16x1xf32> to vector<16x32xf32>
    %184 = arith.subf %169, %183 : vector<16x32xf32>
    %cst_51 = arith.constant 9.99999974E-6 : f32
    %185 = vector.broadcast %cst_51 : f32 to vector<16x1xf32>
    %186 = arith.addf %182, %185 : vector<16x1xf32>
    %187 = math.rsqrt %186 : vector<16x1xf32>
    %188 = vector.broadcast %187 : vector<16x1xf32> to vector<16x32xf32>
    %189 = arith.mulf %184, %188 : vector<16x32xf32>
    %190 = vector.broadcast %166 : vector<1x32xf32> to vector<16x32xf32>
    %191 = arith.mulf %189, %190 : vector<16x32xf32>
    %192 = vector.broadcast %167 : vector<1x32xf32> to vector<16x32xf32>
    %193 = arith.addf %191, %192 : vector<16x32xf32>
    %c2_52 = arith.constant 2 : index
    %c0_53 = arith.constant 0 : index
    %c0_54 = arith.constant 0 : index
    %194 = vector.load %arg4[%c2_52, %c0_53, %c0_54] : memref<4x32x256xbf16, #tpu.memory_space<vmem>>, vector<1x32x256xbf16>
    %195 = vector.shape_cast %194 : vector<1x32x256xbf16> to vector<32x256xbf16>
    %c4 = arith.constant 4 : index
    %c0_55 = arith.constant 0 : index
    %196 = vector.load %arg5[%c4, %c0_55] : memref<7x256xf32, #tpu.memory_space<vmem>>, vector<1x256xf32>
    %c5 = arith.constant 5 : index
    %c0_56 = arith.constant 0 : index
    %197 = vector.load %arg5[%c5, %c0_56] : memref<7x256xf32, #tpu.memory_space<vmem>>, vector<1x256xf32>
    %198 = vector.extract_strided_slice %197 {offsets = [0, 0], sizes = [1, 32], strides = [1, 1]} : vector<1x256xf32> to vector<1x32xf32>
    %199 = vector.extract_strided_slice %197 {offsets = [0, 32], sizes = [1, 32], strides = [1, 1]} : vector<1x256xf32> to vector<1x32xf32>
    %200 = arith.truncf %193 : vector<16x32xf32> to vector<16x32xbf16>
    %cst_57 = arith.constant dense<0.000000e+00> : vector<16x256xf32>
    %201 = tpu.matmul %200, %195, %cst_57 {dimension_numbers = #tpu.dot_dimension_numbers<[1], [0], [0], [1], [0, 0, 1, 1], [], []>} : vector<16x32xbf16>, vector<32x256xbf16>, vector<16x256xf32> -> vector<16x256xf32>
    %202 = vector.broadcast %196 : vector<1x256xf32> to vector<16x256xf32>
    %203 = arith.addf %201, %202 : vector<16x256xf32>
    %204 = vector.extract_strided_slice %203 {offsets = [0, 0], sizes = [16, 32], strides = [1, 1]} : vector<16x256xf32> to vector<16x32xf32>
    %205 = vector.extract_strided_slice %203 {offsets = [0, 32], sizes = [16, 32], strides = [1, 1]} : vector<16x256xf32> to vector<16x32xf32>
    %206 = vector.extract_strided_slice %203 {offsets = [0, 64], sizes = [16, 32], strides = [1, 1]} : vector<16x256xf32> to vector<16x32xf32>
    %207 = vector.extract_strided_slice %203 {offsets = [0, 96], sizes = [16, 32], strides = [1, 1]} : vector<16x256xf32> to vector<16x32xf32>
    %208 = vector.extract_strided_slice %203 {offsets = [0, 128], sizes = [16, 1], strides = [1, 1]} : vector<16x256xf32> to vector<16x1xf32>
    %209 = vector.extract_strided_slice %203 {offsets = [0, 129], sizes = [16, 1], strides = [1, 1]} : vector<16x256xf32> to vector<16x1xf32>
    %210 = arith.truncf %204 : vector<16x32xf32> to vector<16x32xbf16>
    %211 = arith.truncf %205 : vector<16x32xf32> to vector<16x32xbf16>
    %cst_58 = arith.constant dense<0.000000e+00> : vector<16x16xf32>
    %212 = tpu.matmul %210, %211, %cst_58 {dimension_numbers = #tpu.dot_dimension_numbers<[1], [1], [0], [0], [0, 0, 1, 0], [], []>} : vector<16x32xbf16>, vector<16x32xbf16>, vector<16x16xf32> -> vector<16x16xf32>
    %213 = vector.broadcast %208 : vector<16x1xf32> to vector<16x16xf32>
    %214 = arith.mulf %213, %3 : vector<16x16xf32>
    %215 = arith.addf %212, %214 : vector<16x16xf32>
    %cst_59 = arith.constant -1.000000e+30 : f32
    %216 = vector.broadcast %cst_59 : f32 to vector<16x16xf32>
    %217 = arith.select %5, %215, %216 : vector<16x16xi1>, vector<16x16xf32>
    %cst_60 = arith.constant dense<0xFF800000> : vector<16xf32>
    %218 = vector.multi_reduction <maximumf>, %217, %cst_60 [1] : vector<16x16xf32> to vector<16xf32>
    %219 = vector.shape_cast %218 : vector<16xf32> to vector<16x1xf32>
    %220 = vector.broadcast %219 : vector<16x1xf32> to vector<16x16xf32>
    %221 = arith.subf %217, %220 : vector<16x16xf32>
    %222 = math.exp %221 : vector<16x16xf32>
    %223 = arith.mulf %222, %2 : vector<16x16xf32>
    %cst_61 = arith.constant dense<0.000000e+00> : vector<16xf32>
    %224 = vector.multi_reduction <add>, %223, %cst_61 [1] : vector<16x16xf32> to vector<16xf32>
    %225 = vector.shape_cast %224 : vector<16xf32> to vector<16x1xf32>
    %cst_62 = arith.constant 0.000000e+00 : f32
    %226 = vector.broadcast %cst_62 : f32 to vector<16x1xf32>
    %227 = arith.cmpf ogt, %225, %226 : vector<16x1xf32>
    %cst_63 = arith.constant 1.000000e+00 : f32
    %228 = vector.broadcast %cst_63 : f32 to vector<16x1xf32>
    %229 = arith.select %227, %225, %228 : vector<16x1xi1>, vector<16x1xf32>
    %230 = tpu.reciprocal %229 {approx = true} : vector<16x1xf32> -> vector<16x1xf32>
    %231 = vector.broadcast %230 : vector<16x1xf32> to vector<16x16xf32>
    %232 = arith.mulf %223, %231 : vector<16x16xf32>
    %233 = arith.truncf %232 : vector<16x16xf32> to vector<16x16xbf16>
    %234 = arith.truncf %206 : vector<16x32xf32> to vector<16x32xbf16>
    %cst_64 = arith.constant dense<0.000000e+00> : vector<16x32xf32>
    %235 = tpu.matmul %233, %234, %cst_64 {dimension_numbers = #tpu.dot_dimension_numbers<[1], [0], [0], [1], [0, 0, 1, 1], [], []>} : vector<16x16xbf16>, vector<16x32xbf16>, vector<16x32xf32> -> vector<16x32xf32>
    %236 = arith.mulf %232, %3 : vector<16x16xf32>
    %cst_65 = arith.constant dense<0.000000e+00> : vector<16xf32>
    %237 = vector.multi_reduction <add>, %236, %cst_65 [1] : vector<16x16xf32> to vector<16xf32>
    %238 = vector.shape_cast %237 : vector<16xf32> to vector<16x1xf32>
    %239 = vector.broadcast %238 : vector<16x1xf32> to vector<16x32xf32>
    %240 = vector.broadcast %198 : vector<1x32xf32> to vector<16x32xf32>
    %241 = arith.mulf %239, %240 : vector<16x32xf32>
    %242 = arith.addf %235, %241 : vector<16x32xf32>
    %243 = vector.broadcast %199 : vector<1x32xf32> to vector<16x32xf32>
    %244 = arith.mulf %242, %243 : vector<16x32xf32>
    %cst_66 = arith.constant dense<0.000000e+00> : vector<16xf32>
    %245 = vector.multi_reduction <add>, %244, %cst_66 [1] : vector<16x32xf32> to vector<16xf32>
    %246 = vector.shape_cast %245 : vector<16xf32> to vector<16x1xf32>
    %247 = arith.addf %246, %209 : vector<16x1xf32>
    %248 = arith.negf %247 : vector<16x1xf32>
    %249 = math.exp %248 : vector<16x1xf32>
    %cst_67 = arith.constant 1.000000e+00 : f32
    %250 = vector.broadcast %cst_67 : f32 to vector<16x1xf32>
    %251 = arith.addf %250, %249 : vector<16x1xf32>
    %252 = arith.divf %250, %251 : vector<16x1xf32>
    %253 = vector.broadcast %252 : vector<16x1xf32> to vector<16x32xf32>
    %254 = arith.mulf %253, %207 : vector<16x32xf32>
    %cst_68 = arith.constant 1.000000e+00 : f32
    %255 = vector.broadcast %cst_68 : f32 to vector<16x1xf32>
    %256 = arith.subf %255, %252 : vector<16x1xf32>
    %257 = vector.broadcast %256 : vector<16x1xf32> to vector<16x32xf32>
    %258 = arith.mulf %257, %242 : vector<16x32xf32>
    %259 = arith.addf %254, %258 : vector<16x32xf32>
    %c3_69 = arith.constant 3 : index
    %c0_70 = arith.constant 0 : index
    %c0_71 = arith.constant 0 : index
    %260 = vector.load %arg4[%c3_69, %c0_70, %c0_71] : memref<4x32x256xbf16, #tpu.memory_space<vmem>>, vector<1x32x256xbf16>
    %261 = vector.shape_cast %260 : vector<1x32x256xbf16> to vector<32x256xbf16>
    %c6 = arith.constant 6 : index
    %c0_72 = arith.constant 0 : index
    %262 = vector.load %arg5[%c6, %c0_72] : memref<7x256xf32, #tpu.memory_space<vmem>>, vector<1x8xf32>
    %263 = arith.truncf %259 : vector<16x32xf32> to vector<16x32xbf16>
    %cst_73 = arith.constant dense<0.000000e+00> : vector<16x256xf32>
    %264 = tpu.matmul %263, %261, %cst_73 {dimension_numbers = #tpu.dot_dimension_numbers<[1], [0], [0], [1], [0, 0, 1, 1], [], []>} : vector<16x32xbf16>, vector<32x256xbf16>, vector<16x256xf32> -> vector<16x256xf32>
    %265 = vector.extract_strided_slice %264 {offsets = [0, 0], sizes = [16, 8], strides = [1, 1]} : vector<16x256xf32> to vector<16x8xf32>
    %266 = vector.broadcast %262 : vector<1x8xf32> to vector<16x8xf32>
    %267 = arith.addf %265, %266 : vector<16x8xf32>
    %268 = vector.extract_strided_slice %0 {offsets = [0, 0], sizes = [16, 8], strides = [1, 1]} : vector<16x32xf32> to vector<16x8xf32>
    %c0_74 = arith.constant 0 : index
    %c0_75 = arith.constant 0 : index
    %269 = vector.load %arg6[%c0_74, %c0_75] : memref<16x16xf32, #tpu.memory_space<vmem>>, vector<16x8xf32>
    tpu.vector_store %arg6[%c0_74, %c0_75], %268 {strides = array<i32>} : memref<16x16xf32, #tpu.memory_space<vmem>>, vector<16x8xf32>,
    %c0_76 = arith.constant 0 : index
    %c8 = arith.constant 8 : index
    %270 = vector.load %arg6[%c0_76, %c8] : memref<16x16xf32, #tpu.memory_space<vmem>>, vector<16x8xf32>
    tpu.vector_store %arg6[%c0_76, %c8], %267 {strides = array<i32>} : memref<16x16xf32, #tpu.memory_space<vmem>>, vector<16x8xf32>,
    return
  }
  func.func @transform_0(%arg0: i32) -> (i32, i32) {
    %c0_i32 = arith.constant 0 : i32
    %c0_i32_0 = arith.constant 0 : i32
    %c0_i32_1 = arith.constant 0 : i32
    return %c0_i32, %c0_i32_0 : i32, i32
  }
  func.func @transform_1(%arg0: i32) -> (i32, i32) {
    %c0_i32 = arith.constant 0 : i32
    %c0_i32_0 = arith.constant 0 : i32
    %c0_i32_1 = arith.constant 0 : i32
    return %c0_i32, %c0_i32_0 : i32, i32
  }
  func.func @transform_2(%arg0: i32) -> (i32, i32) {
    %c0_i32 = arith.constant 0 : i32
    %c0_i32_0 = arith.constant 0 : i32
    %c0_i32_1 = arith.constant 0 : i32
    return %c0_i32, %c0_i32_0 : i32, i32
  }
  func.func @transform_3(%arg0: i32) -> (i32, i32, i32) {
    %c0_i32 = arith.constant 0 : i32
    %c0_i32_0 = arith.constant 0 : i32
    %c0_i32_1 = arith.constant 0 : i32
    %c0_i32_2 = arith.constant 0 : i32
    return %c0_i32, %c0_i32_0, %c0_i32_1 : i32, i32, i32
  }
  func.func @transform_4(%arg0: i32) -> (i32, i32) {
    %c0_i32 = arith.constant 0 : i32
    %c0_i32_0 = arith.constant 0 : i32
    %c0_i32_1 = arith.constant 0 : i32
    return %c0_i32, %c0_i32_0 : i32, i32
  }
  func.func @transform_5(%arg0: i32) -> (i32, i32) {
    %c0_i32 = arith.constant 0 : i32
    %c0_i32_0 = arith.constant 0 : i32
    %c0_i32_1 = arith.constant 0 : i32
    return %c0_i32, %c0_i32_0 : i32, i32
  }
}

</mosaic_0001>

<llo_original>
// kernel: gtn_forward.1
$region0: #{gtn_forward.1}
  #allocation0 [shape = 'u32[]', space=smem, size = 0x4, offset = 0x4, fixed_abs, tag = 'smem constant byte address 0x4 - core index']
  #allocation1 [shape = 'u32[144,128]{1,0:T(1,128)}', space=vmem, size = 0x12000, scoped, tag = 'internal scratch']
  %s0 = inlined_call_operand.vmem [shape: f32[16,32], index: 0, kind: input, shape index: {}]
  %s1 = inlined_call_operand.vmem [shape: bf16[16,16], index: 1, kind: input, shape index: {}]
  %s2 = inlined_call_operand.vmem [shape: f32[16,16], index: 2, kind: input, shape index: {}]
  %s3 = inlined_call_operand.vmem [shape: bf16[4,32,256], index: 3, kind: input, shape index: {}]
  %s4 = inlined_call_operand.vmem [shape: f32[7,256], index: 4, kind: input, shape index: {}]
  %s5 = inlined_call_operand.hbm [shape: f32[16,16], index: 5, kind: output, shape index: {}]
  %s6 = sld [smem:[#allocation0]]
  $region30: #{gtn_forward.1} parent=0
    _
  %s8 = ssub.s32 1, %s6
  %s9 = scalar_select 0, %s8, %s6
  $region1: #{gtn_forward.1} parent=0
    #allocation2 [shape = 'u8[8192]{0}', space=vmem, size = 0x2000, scoped, tag = 'output window, operand 0, single buffered']
    #allocation3 [shape = 's32[1]{0}', space=sflag, size = 0x4, scoped, tag = 'scoped memory for gtn_forward.1']
    %10 = vsyncpa [#allocation3], 0
    // Predicated region
    $region2: #{gtn_forward.1} parent=1 // pred_check
      _
    $region3: #{gtn_forward.1} parent=1 // pred_check_branch
      %12 = sbr.rel (0) target = $region5
    $region4: #{gtn_forward.1} parent=1 // pred_region
      _
    $region5: #{gtn_forward.1} parent=1 // pred_fallthru
      _
    // Predicated region
    $region6: #{gtn_forward.1} parent=1 // pred_check
      _
    $region7: #{gtn_forward.1} parent=1 // pred_check_branch
      %14 = sbr.rel (0) target = $region9
    $region8: #{gtn_forward.1} parent=1 // pred_region
      _
    $region9: #{gtn_forward.1} parent=1 // pred_fallthru
      _
    // Predicated region
    $region10: #{gtn_forward.1} parent=1 // pred_check
      _
    $region11: #{gtn_forward.1} parent=1 // pred_check_branch
      %16 = sbr.rel (0) target = $region13
    $region12: #{gtn_forward.1} parent=1 // pred_region
      _
    $region13: #{gtn_forward.1} parent=1 // pred_fallthru
      _
    // Predicated region
    $region14: #{gtn_forward.1} parent=1 // pred_check
      _
    $region15: #{gtn_forward.1} parent=1 // pred_check_branch
      %18 = sbr.rel (0) target = $region17
    $region16: #{gtn_forward.1} parent=1 // pred_region
      _
    $region17: #{gtn_forward.1} parent=1 // pred_fallthru
      _
    // Predicated region
    $region18: #{gtn_forward.1} parent=1 // pred_check
      _
    $region19: #{gtn_forward.1} parent=1 // pred_check_branch
      %20 = sbr.rel (0) target = $region21
    $region20: #{gtn_forward.1} parent=1 // pred_region
      _
    $region21: #{gtn_forward.1} parent=1 // pred_fallthru
      _
    %v22 = vld [vmem:[%s0] sm:$0xff]
    %v23 = vld [vmem:[%s0 + $0x8] sm:$0xff]
    %v24 = vld [vmem:[%s1] sm:$0xf]
    %v25 = vld [vmem:[%s1 + $0x4] sm:$0xf]
    %v26 = vunpack.c.l.bf16 %v24
    %v27 = vunpack.c.l.bf16 %v25
    %v28 = vld [vmem:[%s2] sm:$0xff]
    %v29 = vld [vmem:[%s2 + $0x8] sm:$0xff]
    %vm30 = vcmp.gt.f32.partialorder %v26, 0.0
    %vm31 = vcmp.gt.f32.partialorder %v27, 0.0
    %v32 = vld [vmem:[%s3] sm:$0xff]
    %v33 = vld [vmem:[%s3 + $0x8] sm:$0xff]
    %v34 = vld [vmem:[%s3 + $0x10] sm:$0xff]
    %v35 = vld [vmem:[%s3 + $0x18] sm:$0xff]
    %v36 = vld [vmem:[%s4] ss:$8 sm:$0x3]
    %s37 = scalar_lea.vmem %s4, 1
    %v38 = vld [vmem:[%s37] ss:$8 sm:$0x3]
    %v39 = vpack.c.bf16 %v23, %v22
    %v41 = vlaneseq
    %v42 = vshrl.u32 %v41, 7
    %v43 = vsub.s32 0, %v42
    %v44 = vrot.slane %v36, %v43
    %v45 = vlaneseq
    %v46 = vshrl.u32 %v45, 7
    %v47 = vsub.s32 1, %v46
    %v48 = vrot.slane %v36, %v47
    %v55 = vunpack.c.l.b16 %v32
    %v56 = vunpack.c.h.b16 %v32
    %v57 = vunpack.c.l.b16 %v33
    %v58 = vunpack.c.h.b16 %v33
    %v59 = vunpack.c.l.b16 %v34
    %v60 = vunpack.c.h.b16 %v34
    %v61 = vunpack.c.l.b16 %v35
    %v62 = vunpack.c.h.b16 %v35
    %v63 = vpack.c.b16 %v57, %v55
    %v64 = vpack.c.b16 %v58, %v56
    %v65 = vpack.c.b16 %v61, %v59
    %v66 = vpack.c.b16 %v62, %v60
    %vm71 = vcmask 261120
    %v73 = vsel %vm71, %v39, 0
    %75 = vmatprep.subr.bf16.mxu0 %v64
    %76 = vmatpush1.bf16.msra.mxu0 %v63
    %77 = vmatprep.subr.bf16.mxu0 %v66
    %78 = vmatpush1.bf16.msra.mxu0 %v65
    %79 = vmatprep.subr.bf16.mxu0 0
    %80 = vmatpush1.bf16.msra.mxu0 0
    %81 = vmatprep.subr.bf16.mxu0 0
    %82 = vmatpush1.bf16.msra.mxu0 0
    %83 = vmatprep.subr.bf16.mxu0 0
    %84 = vmatpush1.bf16.msra.mxu0 0
    %85 = vmatprep.subr.bf16.mxu0 0
    %86 = vmatpush1.bf16.msra.mxu0 0
    %87 = vmatprep.subr.bf16.mxu0 0
    %88 = vmatpush1.bf16.msra.mxu0 0
    %89 = vmatprep.subr.bf16.mxu0 0
    %90 = vmatpush1.bf16.msra.mxu0 0
    %91 = vmatprep.subr.bf16.mxu0 0
    %92 = vmatpush1.bf16.msra.mxu0 0
    %93 = vmatprep.subr.bf16.mxu0 0
    %94 = vmatpush1.bf16.msra.mxu0 0
    %95 = vmatprep.subr.bf16.mxu0 0
    %96 = vmatpush1.bf16.msra.mxu0 0
    %97 = vmatprep.subr.bf16.mxu0 0
    %98 = vmatpush1.bf16.msra.mxu0 0
    %99 = vmatprep.subr.bf16.mxu0 0
    %100 = vmatpush1.bf16.msra.mxu0 0
    %101 = vmatprep.subr.bf16.mxu0 0
    %102 = vmatpush1.bf16.msra.mxu0 0
    %103 = vmatprep.subr.bf16.mxu0 0
    %104 = vmatpush1.bf16.msra.mxu0 0
    %105 = vmatprep.subr.bf16.mxu0 0
    %106 = vmatpush1.bf16.msra.mxu0 0
    %107 = vmatprep.mubr.bf16.mxu0 0
    %108 = vmatmul.mubr.bf16.gmra.mrb[0].mxu0 %v73
    %v109 = vpop.f32.mrb[0].mxu0
    %v110 = vadd.f32 %v44, %v109
    %v111 = vpop.f32.mrb[0].mxu0
    %v112 = vadd.f32 %v48, %v111
    %v113 = vpop.f32.mrb[0].mxu0
    %v114 = vadd.f32 %v44, %v113
    %v115 = vpop.f32.mrb[0].mxu0
    %v116 = vadd.f32 %v48, %v115
    %117 = vdwg.mxu0
    %v118 = vpack.c.bf16 %v114, %v110
    %120 = vset.pattern.permute.xlu0 0
    %121 = vperm.xlu0 %120, %v112
    %v122 = vpop.permute.xlu0 %121
    %125 = vset.pattern.permute.xlu0 0
    %126 = vperm.xlu0 %125, %v116
    %v127 = vpop.permute.xlu0 %126
    %v129 = vmul.f32 %v122, %v28
    %v130 = vmul.f32 %v127, %v29
    %132 = vrot.lane.b32.xlu0 %v118, 96
    %v133 = vpop.permute.xlu0 %132
    %v135 = vsel %vm71, %v118, 0
    %v138 = vsel %vm71, %v133, 0
    %140 = vmatprep.subr.bf16.mxu0 0
    %141 = vmatpush1.bf16.xpose.msra.mxu0 %v138
    %142 = vmatprep.subr.bf16.mxu0 0
    %143 = vmatpush1.bf16.xpose.msra.mxu0 0
    %144 = vmatprep.subr.bf16.mxu0 0
    %145 = vmatpush1.bf16.xpose.msra.mxu0 0
    %146 = vmatprep.subr.bf16.mxu0 0
    %147 = vmatpush1.bf16.xpose.msra.mxu0 0
    %148 = vmatprep.subr.bf16.mxu0 0
    %149 = vmatpush1.bf16.xpose.msra.mxu0 0
    %150 = vmatprep.subr.bf16.mxu0 0
    %151 = vmatpush1.bf16.xpose.msra.mxu0 0
    %152 = vmatprep.subr.bf16.mxu0 0
    %153 = vmatpush1.bf16.xpose.msra.mxu0 0
    %154 = vmatprep.subr.bf16.mxu0 0
    %155 = vmatpush1.bf16.xpose.msra.mxu0 0
    %156 = vmatprep.subr.bf16.mxu0 0
    %157 = vmatpush1.bf16.xpose.msra.mxu0 0
    %158 = vmatprep.subr.bf16.mxu0 0
    %159 = vmatpush1.bf16.xpose.msra.mxu0 0
    %160 = vmatprep.subr.bf16.mxu0 0
    %161 = vmatpush1.bf16.xpose.msra.mxu0 0
    %162 = vmatprep.subr.bf16.mxu0 0
    %163 = vmatpush1.bf16.xpose.msra.mxu0 0
    %164 = vmatprep.subr.bf16.mxu0 0
    %165 = vmatpush1.bf16.xpose.msra.mxu0 0
    %166 = vmatprep.subr.bf16.mxu0 0
    %167 = vmatpush1.bf16.xpose.msra.mxu0 0
    %168 = vmatprep.subr.bf16.mxu0 0
    %169 = vmatpush1.bf16.xpose.msra.mxu0 0
    %170 = vmatprep.subr.bf16.mxu0 0
    %171 = vmatpush1.bf16.xpose.msra.mxu0 0
    %172 = vmatprep.mubr.bf16.mxu0 0
    %173 = vmatmul.mubr.bf16.gmra.mrb[0].mxu0 %v135
    %v174 = vpop.f32.mrb[0].mxu0
    %v175 = vadd.f32 %v129, %v174
    %v176 = vpop.f32.mrb[0].mxu0
    %v177 = vpop.f32.mrb[0].mxu0
    %v178 = vadd.f32 %v130, %v177
    %v179 = vpop.f32.mrb[0].mxu0
    %180 = vdwg.mxu0
    %v181 = vsel %vm30, %v175, -1e+30
    %v182 = vsel %vm31, %v178, -1e+30
    %vm183 = vcmask 130048
    %v184 = vsel %vm183, %v181, -inf
    %185 = vmax.xlane.f32.xlu0 %v184
    %v186 = vpop.xlane.xlu0 %185
    %v187 = vsel %vm183, %v182, -inf
    %188 = vmax.xlane.f32.xlu0 %v187
    %v189 = vpop.xlane.xlu0 %188
    %v190 = vsub.f32 %v181, %v186
    %v191 = vsub.f32 %v182, %v189
    %v192 = vmul.f32 %v190, 1.442695
    %v193 = vpow.pop %v192
    %v194 = vmul.f32 %v191, 1.442695
    %v195 = vpow.pop %v194
    %v196 = vmul.f32 %v193, %v26
    %v197 = vmul.f32 %v195, %v27
    %v198 = vsel %vm183, %v196, 0.0
    %199 = vadd.xlane.f32.xlu0 %v198
    %v200 = vpop.xlane.xlu0 %199
    %v201 = vsel %vm183, %v197, 0.0
    %202 = vadd.xlane.f32.xlu0 %v201
    %v203 = vpop.xlane.xlu0 %202
    %vm204 = vcmp.gt.f32.partialorder %v200, 0.0
    %vm205 = vcmp.gt.f32.partialorder %v203, 0.0
    %v206 = vsel %vm204, %v200, 1.0
    %v207 = vsel %vm205, %v203, 1.0
    %v208 = vrcp.pop %v206
    %v209 = vrcp.pop %v207
    %v210 = vmul.f32 %v196, %v208
    %v211 = vmul.f32 %v197, %v209
    %v212 = vpack.c.bf16 %v211, %v210
    %v213 = vmul.f32 %v210, %v28
    %v214 = vmul.f32 %v211, %v29
    %v215 = vsel %vm183, %v213, 0.0
    %216 = vadd.xlane.f32.xlu0 %v215
    %v217 = vpop.xlane.xlu0 %216
    %v218 = vsel %vm183, %v214, 0.0
    %219 = vadd.xlane.f32.xlu0 %v218
    %v220 = vpop.xlane.xlu0 %219
    %v222 = vlaneseq
    %v223 = vshrl.u32 %v222, 7
    %v224 = vsub.s32 0, %v223
    %v225 = vrot.slane %v38, %v224
    %v227 = vmul.f32 %v217, %v225
    %v228 = vmul.f32 %v220, %v225
    %229 = vrot.lane.b32.xlu0 %v118, 64
    %v230 = vpop.permute.xlu0 %229
    %v233 = vsel %vm183, %v212, 0
    %235 = vmatprep.subr.bf16.mxu0 0
    %236 = vmatpush1.bf16.msra.mxu0 %v230
    %237 = vmatprep.subr.bf16.mxu0 0
    %238 = vmatpush1.bf16.msra.mxu0 0
    %239 = vmatprep.subr.bf16.mxu0 0
    %240 = vmatpush1.bf16.msra.mxu0 0
    %241 = vmatprep.subr.bf16.mxu0 0
    %242 = vmatpush1.bf16.msra.mxu0 0
    %243 = vmatprep.subr.bf16.mxu0 0
    %244 = vmatpush1.bf16.msra.mxu0 0
    %245 = vmatprep.subr.bf16.mxu0 0
    %246 = vmatpush1.bf16.msra.mxu0 0
    %247 = vmatprep.subr.bf16.mxu0 0
    %248 = vmatpush1.bf16.msra.mxu0 0
    %249 = vmatprep.subr.bf16.mxu0 0
    %250 = vmatpush1.bf16.msra.mxu0 0
    %251 = vmatprep.subr.bf16.mxu0 0
    %252 = vmatpush1.bf16.msra.mxu0 0
    %253 = vmatprep.subr.bf16.mxu0 0
    %254 = vmatpush1.bf16.msra.mxu0 0
    %255 = vmatprep.subr.bf16.mxu0 0
    %256 = vmatpush1.bf16.msra.mxu0 0
    %257 = vmatprep.subr.bf16.mxu0 0
    %258 = vmatpush1.bf16.msra.mxu0 0
    %259 = vmatprep.subr.bf16.mxu0 0
    %260 = vmatpush1.bf16.msra.mxu0 0
    %261 = vmatprep.subr.bf16.mxu0 0
    %262 = vmatpush1.bf16.msra.mxu0 0
    %263 = vmatprep.subr.bf16.mxu0 0
    %264 = vmatpush1.bf16.msra.mxu0 0
    %265 = vmatprep.subr.bf16.mxu0 0
    %266 = vmatpush1.bf16.msra.mxu0 0
    %267 = vmatprep.mubr.bf16.mxu0 0
    %268 = vmatmul.mubr.bf16.gmra.mrb[0].mxu0 %v233
    %v269 = vpop.f32.mrb[0].mxu0
    %v270 = vadd.f32 %v227, %v269
    %v271 = vpop.f32.mrb[0].mxu0
    %v272 = vpop.f32.mrb[0].mxu0
    %v273 = vadd.f32 %v228, %v272
    %v274 = vpop.f32.mrb[0].mxu0
    %275 = vdwg.mxu0
    %276 = vrot.lane.b32.xlu0 %v225, 96
    %v277 = vpop.permute.xlu0 %276
    %v279 = vmul.f32 %v270, %v277
    %v280 = vmul.f32 %v273, %v277
    %v281 = vsel %vm71, %v279, 0.0
    %282 = vadd.xlane.f32.xlu0 %v281
    %v283 = vpop.xlane.xlu0 %282
    %v284 = vsel %vm71, %v280, 0.0
    %285 = vadd.xlane.f32.xlu0 %v284
    %v286 = vpop.xlane.xlu0 %285
    %v287 = vadd.f32 %v283, %v112
    %v288 = vadd.f32 %v286, %v116
    %v289 = vxor.u32 %v287, 2147483648
    %v290 = vxor.u32 %v288, 2147483648
    %v291 = vmul.f32 %v289, 1.442695
    %v292 = vpow.pop %v291
    %v293 = vmul.f32 %v290, 1.442695
    %v294 = vpow.pop %v293
    %v295 = vadd.f32 %v292, 1.0
    %v296 = vadd.f32 %v294, 1.0
    %v297 = vrcp.pop %v295
    %v298 = vmul.f32 1.0, %v297
    %v299 = vrcp.pop %v296
    %v300 = vmul.f32 1.0, %v299
    %302 = vset.pattern.permute.xlu0 1
    %303 = vperm.xlu0 %302, %v298
    %v304 = vpop.permute.xlu0 %303
    %307 = vset.pattern.permute.xlu0 1
    %308 = vperm.xlu0 %307, %v300
    %v309 = vpop.permute.xlu0 %308
    %v311 = vmul.f32 %v304, %v110
    %v312 = vmul.f32 %v309, %v114
    %v313 = vsub.f32 1.0, %v298
    %v314 = vsub.f32 1.0, %v300
    %316 = vset.pattern.permute.xlu0 1
    %317 = vperm.xlu0 %316, %v313
    %v318 = vpop.permute.xlu0 %317
    %321 = vset.pattern.permute.xlu0 1
    %322 = vperm.xlu0 %321, %v314
    %v323 = vpop.permute.xlu0 %322
    %v325 = vmul.f32 %v318, %v270
    %v326 = vmul.f32 %v323, %v273
    %329 = vrot.lane.b32.xlu0 %v325, 96
    %v330 = vpop.permute.xlu0 %329
    %331 = vrot.lane.b32.xlu0 %v326, 96
    %v332 = vpop.permute.xlu0 %331
    %v335 = vadd.f32 %v311, %v330
    %v336 = vadd.f32 %v312, %v332
    %v337 = vmax.f32 %v335, 0.0
    %v338 = vmax.f32 %v336, 0.0
    %341 = vrot.lane.b32.xlu0 %v337, 32
    %v342 = vpop.permute.xlu0 %341
    %343 = vrot.lane.b32.xlu0 %v338, 32
    %v344 = vpop.permute.xlu0 %343
    %v347 = vsel %vm71, %v342, 0.0
    %348 = vadd.xlane.f32.xlu0 %v347
    %v349 = vpop.xlane.xlu0 %348
    %v350 = vsel %vm71, %v344, 0.0
    %351 = vadd.xlane.f32.xlu0 %v350
    %v352 = vpop.xlane.xlu0 %351
    %v353 = vrcp.pop 32.0
    %v354 = vmul.f32 %v349, %v353
    %v355 = vmul.f32 %v352, %v353
    %v356 = vsub.f32 %v337, %v354
    %v357 = vsub.f32 %v338, %v355
    %v358 = vmul.f32 %v356, %v356
    %v359 = vmul.f32 %v357, %v357
    %362 = vrot.lane.b32.xlu0 %v358, 32
    %v363 = vpop.permute.xlu0 %362
    %364 = vrot.lane.b32.xlu0 %v359, 32
    %v365 = vpop.permute.xlu0 %364
    %v368 = vsel %vm71, %v363, 0.0
    %369 = vadd.xlane.f32.xlu0 %v368
    %v370 = vpop.xlane.xlu0 %369
    %v371 = vsel %vm71, %v365, 0.0
    %372 = vadd.xlane.f32.xlu0 %v371
    %v373 = vpop.xlane.xlu0 %372
    %v374 = vmul.f32 %v370, %v353
    %v375 = vmul.f32 %v373, %v353
    %v376 = vadd.f32 %v374, 1e-05
    %v377 = vadd.f32 %v375, 1e-05
    %v378 = vrsqrt.pop %v376
    %v379 = vrsqrt.pop %v377
    %v380 = vmul.f32 %v356, %v378
    %v381 = vmul.f32 %v357, %v379
    %382 = vrot.lane.b32.xlu0 %v225, 32
    %v383 = vpop.permute.xlu0 %382
    %v385 = vmul.f32 %v380, %v383
    %v386 = vmul.f32 %v381, %v383
    %v387 = vadd.f32 %v385, %v225
    %v388 = vadd.f32 %v386, %v225
    %s389 = scalar_lea.vmem %s3, 32
    %v390 = vld [vmem:[%s389] sm:$0xff]
    %v391 = vld [vmem:[%s389 + $0x8] sm:$0xff]
    %v392 = vld [vmem:[%s389 + $0x10] sm:$0xff]
    %v393 = vld [vmem:[%s389 + $0x18] sm:$0xff]
    %s394 = scalar_lea.vmem %s4, 2
    %v395 = vld [vmem:[%s394] ss:$8 sm:$0x3]
    %s396 = scalar_lea.vmem %s4, 3
    %v397 = vld [vmem:[%s396] ss:$8 sm:$0x3]
    %v398 = vpack.c.bf16 %v388, %v387
    %v400 = vlaneseq
    %v401 = vshrl.u32 %v400, 7
    %v402 = vsub.s32 0, %v401
    %v403 = vrot.slane %v395, %v402
    %v404 = vlaneseq
    %v405 = vshrl.u32 %v404, 7
    %v406 = vsub.s32 1, %v405
    %v407 = vrot.slane %v395, %v406
    %411 = vrot.lane.b32.xlu0 %v398, 32
    %v412 = vpop.permute.xlu0 %411
    %v417 = vunpack.c.l.b16 %v390
    %v418 = vunpack.c.h.b16 %v390
    %v419 = vunpack.c.l.b16 %v391
    %v420 = vunpack.c.h.b16 %v391
    %v421 = vunpack.c.l.b16 %v392
    %v422 = vunpack.c.h.b16 %v392
    %v423 = vunpack.c.l.b16 %v393
    %v424 = vunpack.c.h.b16 %v393
    %v425 = vpack.c.b16 %v419, %v417
    %v426 = vpack.c.b16 %v420, %v418
    %v427 = vpack.c.b16 %v423, %v421
    %v428 = vpack.c.b16 %v424, %v422
    %v434 = vsel %vm71, %v412, 0
    %436 = vmatprep.subr.bf16.mxu0 %v426
    %437 = vmatpush1.bf16.msra.mxu0 %v425
    %438 = vmatprep.subr.bf16.mxu0 %v428
    %439 = vmatpush1.bf16.msra.mxu0 %v427
    %440 = vmatprep.subr.bf16.mxu0 0
    %441 = vmatpush1.bf16.msra.mxu0 0
    %442 = vmatprep.subr.bf16.mxu0 0
    %443 = vmatpush1.bf16.msra.mxu0 0
    %444 = vmatprep.subr.bf16.mxu0 0
    %445 = vmatpush1.bf16.msra.mxu0 0
    %446 = vmatprep.subr.bf16.mxu0 0
    %447 = vmatpush1.bf16.msra.mxu0 0
    %448 = vmatprep.subr.bf16.mxu0 0
    %449 = vmatpush1.bf16.msra.mxu0 0
    %450 = vmatprep.subr.bf16.mxu0 0
    %451 = vmatpush1.bf16.msra.mxu0 0
    %452 = vmatprep.subr.bf16.mxu0 0
    %453 = vmatpush1.bf16.msra.mxu0 0
    %454 = vmatprep.subr.bf16.mxu0 0
    %455 = vmatpush1.bf16.msra.mxu0 0
    %456 = vmatprep.subr.bf16.mxu0 0
    %457 = vmatpush1.bf16.msra.mxu0 0
    %458 = vmatprep.subr.bf16.mxu0 0
    %459 = vmatpush1.bf16.msra.mxu0 0
    %460 = vmatprep.subr.bf16.mxu0 0
    %461 = vmatpush1.bf16.msra.mxu0 0
    %462 = vmatprep.subr.bf16.mxu0 0
    %463 = vmatpush1.bf16.msra.mxu0 0
    %464 = vmatprep.subr.bf16.mxu0 0
    %465 = vmatpush1.bf16.msra.mxu0 0
    %466 = vmatprep.subr.bf16.mxu0 0
    %467 = vmatpush1.bf16.msra.mxu0 0
    %468 = vmatprep.mubr.bf16.mxu0 0
    %469 = vmatmul.mubr.bf16.gmra.mrb[0].mxu0 %v434
    %v470 = vpop.f32.mrb[0].mxu0
    %v471 = vadd.f32 %v403, %v470
    %v472 = vpop.f32.mrb[0].mxu0
    %v473 = vadd.f32 %v407, %v472
    %v474 = vpop.f32.mrb[0].mxu0
    %v475 = vadd.f32 %v403, %v474
    %v476 = vpop.f32.mrb[0].mxu0
    %v477 = vadd.f32 %v407, %v476
    %478 = vdwg.mxu0
    %v479 = vpack.c.bf16 %v475, %v471
    %481 = vset.pattern.permute.xlu0 0
    %482 = vperm.xlu0 %481, %v473
    %v483 = vpop.permute.xlu0 %482
    %486 = vset.pattern.permute.xlu0 0
    %487 = vperm.xlu0 %486, %v477
    %v488 = vpop.permute.xlu0 %487
    %v490 = vmul.f32 %v483, %v28
    %v491 = vmul.f32 %v488, %v29
    %493 = vrot.lane.b32.xlu0 %v479, 96
    %v494 = vpop.permute.xlu0 %493
    %v496 = vsel %vm71, %v479, 0
    %v499 = vsel %vm71, %v494, 0
    %501 = vmatprep.subr.bf16.mxu0 0
    %502 = vmatpush1.bf16.xpose.msra.mxu0 %v499
    %503 = vmatprep.subr.bf16.mxu0 0
    %504 = vmatpush1.bf16.xpose.msra.mxu0 0
    %505 = vmatprep.subr.bf16.mxu0 0
    %506 = vmatpush1.bf16.xpose.msra.mxu0 0
    %507 = vmatprep.subr.bf16.mxu0 0
    %508 = vmatpush1.bf16.xpose.msra.mxu0 0
    %509 = vmatprep.subr.bf16.mxu0 0
    %510 = vmatpush1.bf16.xpose.msra.mxu0 0
    %511 = vmatprep.subr.bf16.mxu0 0
    %512 = vmatpush1.bf16.xpose.msra.mxu0 0
    %513 = vmatprep.subr.bf16.mxu0 0
    %514 = vmatpush1.bf16.xpose.msra.mxu0 0
    %515 = vmatprep.subr.bf16.mxu0 0
    %516 = vmatpush1.bf16.xpose.msra.mxu0 0
    %517 = vmatprep.subr.bf16.mxu0 0
    %518 = vmatpush1.bf16.xpose.msra.mxu0 0
    %519 = vmatprep.subr.bf16.mxu0 0
    %520 = vmatpush1.bf16.xpose.msra.mxu0 0
    %521 = vmatprep.subr.bf16.mxu0 0
    %522 = vmatpush1.bf16.xpose.msra.mxu0 0
    %523 = vmatprep.subr.bf16.mxu0 0
    %524 = vmatpush1.bf16.xpose.msra.mxu0 0
    %525 = vmatprep.subr.bf16.mxu0 0
    %526 = vmatpush1.bf16.xpose.msra.mxu0 0
    %527 = vmatprep.subr.bf16.mxu0 0
    %528 = vmatpush1.bf16.xpose.msra.mxu0 0
    %529 = vmatprep.subr.bf16.mxu0 0
    %530 = vmatpush1.bf16.xpose.msra.mxu0 0
    %531 = vmatprep.subr.bf16.mxu0 0
    %532 = vmatpush1.bf16.xpose.msra.mxu0 0
    %533 = vmatprep.mubr.bf16.mxu0 0
    %534 = vmatmul.mubr.bf16.gmra.mrb[0].mxu0 %v496
    %v535 = vpop.f32.mrb[0].mxu0
    %v536 = vadd.f32 %v490, %v535
    %v537 = vpop.f32.mrb[0].mxu0
    %v538 = vpop.f32.mrb[0].mxu0
    %v539 = vadd.f32 %v491, %v538
    %v540 = vpop.f32.mrb[0].mxu0
    %541 = vdwg.mxu0
    %v542 = vsel %vm30, %v536, -1e+30
    %v543 = vsel %vm31, %v539, -1e+30
    %v544 = vsel %vm183, %v542, -inf
    %545 = vmax.xlane.f32.xlu0 %v544
    %v546 = vpop.xlane.xlu0 %545
    %v547 = vsel %vm183, %v543, -inf
    %548 = vmax.xlane.f32.xlu0 %v547
    %v549 = vpop.xlane.xlu0 %548
    %v550 = vsub.f32 %v542, %v546
    %v551 = vsub.f32 %v543, %v549
    %v552 = vmul.f32 %v550, 1.442695
    %v553 = vpow.pop %v552
    %v554 = vmul.f32 %v551, 1.442695
    %v555 = vpow.pop %v554
    %v556 = vmul.f32 %v553, %v26
    %v557 = vmul.f32 %v555, %v27
    %v558 = vsel %vm183, %v556, 0.0
    %559 = vadd.xlane.f32.xlu0 %v558
    %v560 = vpop.xlane.xlu0 %559
    %v561 = vsel %vm183, %v557, 0.0
    %562 = vadd.xlane.f32.xlu0 %v561
    %v563 = vpop.xlane.xlu0 %562
    %vm564 = vcmp.gt.f32.partialorder %v560, 0.0
    %vm565 = vcmp.gt.f32.partialorder %v563, 0.0
    %v566 = vsel %vm564, %v560, 1.0
    %v567 = vsel %vm565, %v563, 1.0
    %v568 = vrcp.pop %v566
    %v569 = vrcp.pop %v567
    %v570 = vmul.f32 %v556, %v568
    %v571 = vmul.f32 %v557, %v569
    %v572 = vpack.c.bf16 %v571, %v570
    %v573 = vmul.f32 %v570, %v28
    %v574 = vmul.f32 %v571, %v29
    %v575 = vsel %vm183, %v573, 0.0
    %576 = vadd.xlane.f32.xlu0 %v575
    %v577 = vpop.xlane.xlu0 %576
    %v578 = vsel %vm183, %v574, 0.0
    %579 = vadd.xlane.f32.xlu0 %v578
    %v580 = vpop.xlane.xlu0 %579
    %v582 = vlaneseq
    %v583 = vshrl.u32 %v582, 7
    %v584 = vsub.s32 0, %v583
    %v585 = vrot.slane %v397, %v584
    %v587 = vmul.f32 %v577, %v585
    %v588 = vmul.f32 %v580, %v585
    %589 = vrot.lane.b32.xlu0 %v479, 64
    %v590 = vpop.permute.xlu0 %589
    %v593 = vsel %vm183, %v572, 0
    %595 = vmatprep.subr.bf16.mxu0 0
    %596 = vmatpush1.bf16.msra.mxu0 %v590
    %597 = vmatprep.subr.bf16.mxu0 0
    %598 = vmatpush1.bf16.msra.mxu0 0
    %599 = vmatprep.subr.bf16.mxu0 0
    %600 = vmatpush1.bf16.msra.mxu0 0
    %601 = vmatprep.subr.bf16.mxu0 0
    %602 = vmatpush1.bf16.msra.mxu0 0
    %603 = vmatprep.subr.bf16.mxu0 0
    %604 = vmatpush1.bf16.msra.mxu0 0
    %605 = vmatprep.subr.bf16.mxu0 0
    %606 = vmatpush1.bf16.msra.mxu0 0
    %607 = vmatprep.subr.bf16.mxu0 0
    %608 = vmatpush1.bf16.msra.mxu0 0
    %609 = vmatprep.subr.bf16.mxu0 0
    %610 = vmatpush1.bf16.msra.mxu0 0
    %611 = vmatprep.subr.bf16.mxu0 0
    %612 = vmatpush1.bf16.msra.mxu0 0
    %613 = vmatprep.subr.bf16.mxu0 0
    %614 = vmatpush1.bf16.msra.mxu0 0
    %615 = vmatprep.subr.bf16.mxu0 0
    %616 = vmatpush1.bf16.msra.mxu0 0
    %617 = vmatprep.subr.bf16.mxu0 0
    %618 = vmatpush1.bf16.msra.mxu0 0
    %619 = vmatprep.subr.bf16.mxu0 0
    %620 = vmatpush1.bf16.msra.mxu0 0
    %621 = vmatprep.subr.bf16.mxu0 0
    %622 = vmatpush1.bf16.msra.mxu0 0
    %623 = vmatprep.subr.bf16.mxu0 0
    %624 = vmatpush1.bf16.msra.mxu0 0
    %625 = vmatprep.subr.bf16.mxu0 0
    %626 = vmatpush1.bf16.msra.mxu0 0
    %627 = vmatprep.mubr.bf16.mxu0 0
    %628 = vmatmul.mubr.bf16.gmra.mrb[0].mxu0 %v593
    %v629 = vpop.f32.mrb[0].mxu0
    %v630 = vadd.f32 %v587, %v629
    %v631 = vpop.f32.mrb[0].mxu0
    %v632 = vpop.f32.mrb[0].mxu0
    %v633 = vadd.f32 %v588, %v632
    %v634 = vpop.f32.mrb[0].mxu0
    %635 = vdwg.mxu0
    %636 = vrot.lane.b32.xlu0 %v585, 96
    %v637 = vpop.permute.xlu0 %636
    %v639 = vmul.f32 %v630, %v637
    %v640 = vmul.f32 %v633, %v637
    %v641 = vsel %vm71, %v639, 0.0
    %642 = vadd.xlane.f32.xlu0 %v641
    %v643 = vpop.xlane.xlu0 %642
    %v644 = vsel %vm71, %v640, 0.0
    %645 = vadd.xlane.f32.xlu0 %v644
    %v646 = vpop.xlane.xlu0 %645
    %v647 = vadd.f32 %v643, %v473
    %v648 = vadd.f32 %v646, %v477
    %v649 = vxor.u32 %v647, 2147483648
    %v650 = vxor.u32 %v648, 2147483648
    %v651 = vmul.f32 %v649, 1.442695
    %v652 = vpow.pop %v651
    %v653 = vmul.f32 %v650, 1.442695
    %v654 = vpow.pop %v653
    %v655 = vadd.f32 %v652, 1.0
    %v656 = vadd.f32 %v654, 1.0
    %v657 = vrcp.pop %v655
    %v658 = vmul.f32 1.0, %v657
    %v659 = vrcp.pop %v656
    %v660 = vmul.f32 1.0, %v659
    %662 = vset.pattern.permute.xlu0 1
    %663 = vperm.xlu0 %662, %v658
    %v664 = vpop.permute.xlu0 %663
    %667 = vset.pattern.permute.xlu0 1
    %668 = vperm.xlu0 %667, %v660
    %v669 = vpop.permute.xlu0 %668
    %v671 = vmul.f32 %v664, %v471
    %v672 = vmul.f32 %v669, %v475
    %v673 = vsub.f32 1.0, %v658
    %v674 = vsub.f32 1.0, %v660
    %676 = vset.pattern.permute.xlu0 1
    %677 = vperm.xlu0 %676, %v673
    %v678 = vpop.permute.xlu0 %677
    %681 = vset.pattern.permute.xlu0 1
    %682 = vperm.xlu0 %681, %v674
    %v683 = vpop.permute.xlu0 %682
    %v685 = vmul.f32 %v678, %v630
    %v686 = vmul.f32 %v683, %v633
    %689 = vrot.lane.b32.xlu0 %v685, 96
    %v690 = vpop.permute.xlu0 %689
    %691 = vrot.lane.b32.xlu0 %v686, 96
    %v692 = vpop.permute.xlu0 %691
    %v695 = vadd.f32 %v671, %v690
    %v696 = vadd.f32 %v672, %v692
    %v697 = vmax.f32 %v695, 0.0
    %v698 = vmax.f32 %v696, 0.0
    %701 = vrot.lane.b32.xlu0 %v697, 32
    %v702 = vpop.permute.xlu0 %701
    %703 = vrot.lane.b32.xlu0 %v698, 32
    %v704 = vpop.permute.xlu0 %703
    %v707 = vsel %vm71, %v702, 0.0
    %708 = vadd.xlane.f32.xlu0 %v707
    %v709 = vpop.xlane.xlu0 %708
    %v710 = vsel %vm71, %v704, 0.0
    %711 = vadd.xlane.f32.xlu0 %v710
    %v712 = vpop.xlane.xlu0 %711
    %v713 = vmul.f32 %v709, %v353
    %v714 = vmul.f32 %v712, %v353
    %v715 = vsub.f32 %v697, %v713
    %v716 = vsub.f32 %v698, %v714
    %v717 = vmul.f32 %v715, %v715
    %v718 = vmul.f32 %v716, %v716
    %721 = vrot.lane.b32.xlu0 %v717, 32
    %v722 = vpop.permute.xlu0 %721
    %723 = vrot.lane.b32.xlu0 %v718, 32
    %v724 = vpop.permute.xlu0 %723
    %v727 = vsel %vm71, %v722, 0.0
    %728 = vadd.xlane.f32.xlu0 %v727
    %v729 = vpop.xlane.xlu0 %728
    %v730 = vsel %vm71, %v724, 0.0
    %731 = vadd.xlane.f32.xlu0 %v730
    %v732 = vpop.xlane.xlu0 %731
    %v733 = vmul.f32 %v729, %v353
    %v734 = vmul.f32 %v732, %v353
    %v735 = vadd.f32 %v733, 1e-05
    %v736 = vadd.f32 %v734, 1e-05
    %v737 = vrsqrt.pop %v735
    %v738 = vrsqrt.pop %v736
    %v739 = vmul.f32 %v715, %v737
    %v740 = vmul.f32 %v716, %v738
    %741 = vrot.lane.b32.xlu0 %v585, 32
    %v742 = vpop.permute.xlu0 %741
    %v744 = vmul.f32 %v739, %v742
    %v745 = vmul.f32 %v740, %v742
    %v746 = vadd.f32 %v744, %v585
    %v747 = vadd.f32 %v745, %v585
    %s748 = scalar_lea.vmem %s3, 64
    %v749 = vld [vmem:[%s748] sm:$0xff]
    %v750 = vld [vmem:[%s748 + $0x8] sm:$0xff]
    %v751 = vld [vmem:[%s748 + $0x10] sm:$0xff]
    %v752 = vld [vmem:[%s748 + $0x18] sm:$0xff]
    %s753 = scalar_lea.vmem %s4, 4
    %v754 = vld [vmem:[%s753] ss:$8 sm:$0x3]
    %s755 = scalar_lea.vmem %s4, 5
    %v756 = vld [vmem:[%s755] ss:$8 sm:$0x3]
    %v757 = vpack.c.bf16 %v747, %v746
    %v759 = vlaneseq
    %v760 = vshrl.u32 %v759, 7
    %v761 = vsub.s32 0, %v760
    %v762 = vrot.slane %v754, %v761
    %v763 = vlaneseq
    %v764 = vshrl.u32 %v763, 7
    %v765 = vsub.s32 1, %v764
    %v766 = vrot.slane %v754, %v765
    %770 = vrot.lane.b32.xlu0 %v757, 32
    %v771 = vpop.permute.xlu0 %770
    %v776 = vunpack.c.l.b16 %v749
    %v777 = vunpack.c.h.b16 %v749
    %v778 = vunpack.c.l.b16 %v750
    %v779 = vunpack.c.h.b16 %v750
    %v780 = vunpack.c.l.b16 %v751
    %v781 = vunpack.c.h.b16 %v751
    %v782 = vunpack.c.l.b16 %v752
    %v783 = vunpack.c.h.b16 %v752
    %v784 = vpack.c.b16 %v778, %v776
    %v785 = vpack.c.b16 %v779, %v777
    %v786 = vpack.c.b16 %v782, %v780
    %v787 = vpack.c.b16 %v783, %v781
    %v793 = vsel %vm71, %v771, 0
    %795 = vmatprep.subr.bf16.mxu0 %v785
    %796 = vmatpush1.bf16.msra.mxu0 %v784
    %797 = vmatprep.subr.bf16.mxu0 %v787
    %798 = vmatpush1.bf16.msra.mxu0 %v786
    %799 = vmatprep.subr.bf16.mxu0 0
    %800 = vmatpush1.bf16.msra.mxu0 0
    %801 = vmatprep.subr.bf16.mxu0 0
    %802 = vmatpush1.bf16.msra.mxu0 0
    %803 = vmatprep.subr.bf16.mxu0 0
    %804 = vmatpush1.bf16.msra.mxu0 0
    %805 = vmatprep.subr.bf16.mxu0 0
    %806 = vmatpush1.bf16.msra.mxu0 0
    %807 = vmatprep.subr.bf16.mxu0 0
    %808 = vmatpush1.bf16.msra.mxu0 0
    %809 = vmatprep.subr.bf16.mxu0 0
    %810 = vmatpush1.bf16.msra.mxu0 0
    %811 = vmatprep.subr.bf16.mxu0 0
    %812 = vmatpush1.bf16.msra.mxu0 0
    %813 = vmatprep.subr.bf16.mxu0 0
    %814 = vmatpush1.bf16.msra.mxu0 0
    %815 = vmatprep.subr.bf16.mxu0 0
    %816 = vmatpush1.bf16.msra.mxu0 0
    %817 = vmatprep.subr.bf16.mxu0 0
    %818 = vmatpush1.bf16.msra.mxu0 0
    %819 = vmatprep.subr.bf16.mxu0 0
    %820 = vmatpush1.bf16.msra.mxu0 0
    %821 = vmatprep.subr.bf16.mxu0 0
    %822 = vmatpush1.bf16.msra.mxu0 0
    %823 = vmatprep.subr.bf16.mxu0 0
    %824 = vmatpush1.bf16.msra.mxu0 0
    %825 = vmatprep.subr.bf16.mxu0 0
    %826 = vmatpush1.bf16.msra.mxu0 0
    %827 = vmatprep.mubr.bf16.mxu0 0
    %828 = vmatmul.mubr.bf16.gmra.mrb[0].mxu0 %v793
    %v829 = vpop.f32.mrb[0].mxu0
    %v830 = vadd.f32 %v762, %v829
    %v831 = vpop.f32.mrb[0].mxu0
    %v832 = vadd.f32 %v766, %v831
    %v833 = vpop.f32.mrb[0].mxu0
    %v834 = vadd.f32 %v762, %v833
    %v835 = vpop.f32.mrb[0].mxu0
    %v836 = vadd.f32 %v766, %v835
    %837 = vdwg.mxu0
    %v838 = vpack.c.bf16 %v834, %v830
    %840 = vset.pattern.permute.xlu0 0
    %841 = vperm.xlu0 %840, %v832
    %v842 = vpop.permute.xlu0 %841
    %845 = vset.pattern.permute.xlu0 0
    %846 = vperm.xlu0 %845, %v836
    %v847 = vpop.permute.xlu0 %846
    %v849 = vmul.f32 %v842, %v28
    %v850 = vmul.f32 %v847, %v29
    %852 = vrot.lane.b32.xlu0 %v838, 96
    %v853 = vpop.permute.xlu0 %852
    %v855 = vsel %vm71, %v838, 0
    %v858 = vsel %vm71, %v853, 0
    %860 = vmatprep.subr.bf16.mxu0 0
    %861 = vmatpush1.bf16.xpose.msra.mxu0 %v858
    %862 = vmatprep.subr.bf16.mxu0 0
    %863 = vmatpush1.bf16.xpose.msra.mxu0 0
    %864 = vmatprep.subr.bf16.mxu0 0
    %865 = vmatpush1.bf16.xpose.msra.mxu0 0
    %866 = vmatprep.subr.bf16.mxu0 0
    %867 = vmatpush1.bf16.xpose.msra.mxu0 0
    %868 = vmatprep.subr.bf16.mxu0 0
    %869 = vmatpush1.bf16.xpose.msra.mxu0 0
    %870 = vmatprep.subr.bf16.mxu0 0
    %871 = vmatpush1.bf16.xpose.msra.mxu0 0
    %872 = vmatprep.subr.bf16.mxu0 0
    %873 = vmatpush1.bf16.xpose.msra.mxu0 0
    %874 = vmatprep.subr.bf16.mxu0 0
    %875 = vmatpush1.bf16.xpose.msra.mxu0 0
    %876 = vmatprep.subr.bf16.mxu0 0
    %877 = vmatpush1.bf16.xpose.msra.mxu0 0
    %878 = vmatprep.subr.bf16.mxu0 0
    %879 = vmatpush1.bf16.xpose.msra.mxu0 0
    %880 = vmatprep.subr.bf16.mxu0 0
    %881 = vmatpush1.bf16.xpose.msra.mxu0 0
    %882 = vmatprep.subr.bf16.mxu0 0
    %883 = vmatpush1.bf16.xpose.msra.mxu0 0
    %884 = vmatprep.subr.bf16.mxu0 0
    %885 = vmatpush1.bf16.xpose.msra.mxu0 0
    %886 = vmatprep.subr.bf16.mxu0 0
    %887 = vmatpush1.bf16.xpose.msra.mxu0 0
    %888 = vmatprep.subr.bf16.mxu0 0
    %889 = vmatpush1.bf16.xpose.msra.mxu0 0
    %890 = vmatprep.subr.bf16.mxu0 0
    %891 = vmatpush1.bf16.xpose.msra.mxu0 0
    %892 = vmatprep.mubr.bf16.mxu0 0
    %893 = vmatmul.mubr.bf16.gmra.mrb[0].mxu0 %v855
    %v894 = vpop.f32.mrb[0].mxu0
    %v895 = vadd.f32 %v849, %v894
    %v896 = vpop.f32.mrb[0].mxu0
    %v897 = vpop.f32.mrb[0].mxu0
    %v898 = vadd.f32 %v850, %v897
    %v899 = vpop.f32.mrb[0].mxu0
    %900 = vdwg.mxu0
    %v901 = vsel %vm30, %v895, -1e+30
    %v902 = vsel %vm31, %v898, -1e+30
    %v903 = vsel %vm183, %v901, -inf
    %904 = vmax.xlane.f32.xlu0 %v903
    %v905 = vpop.xlane.xlu0 %904
    %v906 = vsel %vm183, %v902, -inf
    %907 = vmax.xlane.f32.xlu0 %v906
    %v908 = vpop.xlane.xlu0 %907
    %v909 = vsub.f32 %v901, %v905
    %v910 = vsub.f32 %v902, %v908
    %v911 = vmul.f32 %v909, 1.442695
    %v912 = vpow.pop %v911
    %v913 = vmul.f32 %v910, 1.442695
    %v914 = vpow.pop %v913
    %v915 = vmul.f32 %v912, %v26
    %v916 = vmul.f32 %v914, %v27
    %v917 = vsel %vm183, %v915, 0.0
    %918 = vadd.xlane.f32.xlu0 %v917
    %v919 = vpop.xlane.xlu0 %918
    %v920 = vsel %vm183, %v916, 0.0
    %921 = vadd.xlane.f32.xlu0 %v920
    %v922 = vpop.xlane.xlu0 %921
    %vm923 = vcmp.gt.f32.partialorder %v919, 0.0
    %vm924 = vcmp.gt.f32.partialorder %v922, 0.0
    %v925 = vsel %vm923, %v919, 1.0
    %v926 = vsel %vm924, %v922, 1.0
    %v927 = vrcp.pop %v925
    %v928 = vrcp.pop %v926
    %v929 = vmul.f32 %v915, %v927
    %v930 = vmul.f32 %v916, %v928
    %v931 = vpack.c.bf16 %v930, %v929
    %v932 = vmul.f32 %v929, %v28
    %v933 = vmul.f32 %v930, %v29
    %v934 = vsel %vm183, %v932, 0.0
    %935 = vadd.xlane.f32.xlu0 %v934
    %v936 = vpop.xlane.xlu0 %935
    %v937 = vsel %vm183, %v933, 0.0
    %938 = vadd.xlane.f32.xlu0 %v937
    %v939 = vpop.xlane.xlu0 %938
    %v941 = vlaneseq
    %v942 = vshrl.u32 %v941, 7
    %v943 = vsub.s32 0, %v942
    %v944 = vrot.slane %v756, %v943
    %v946 = vmul.f32 %v936, %v944
    %v947 = vmul.f32 %v939, %v944
    %948 = vrot.lane.b32.xlu0 %v838, 64
    %v949 = vpop.permute.xlu0 %948
    %v952 = vsel %vm183, %v931, 0
    %954 = vmatprep.subr.bf16.mxu0 0
    %955 = vmatpush1.bf16.msra.mxu0 %v949
    %956 = vmatprep.subr.bf16.mxu0 0
    %957 = vmatpush1.bf16.msra.mxu0 0
    %958 = vmatprep.subr.bf16.mxu0 0
    %959 = vmatpush1.bf16.msra.mxu0 0
    %960 = vmatprep.subr.bf16.mxu0 0
    %961 = vmatpush1.bf16.msra.mxu0 0
    %962 = vmatprep.subr.bf16.mxu0 0
    %963 = vmatpush1.bf16.msra.mxu0 0
    %964 = vmatprep.subr.bf16.mxu0 0
    %965 = vmatpush1.bf16.msra.mxu0 0
    %966 = vmatprep.subr.bf16.mxu0 0
    %967 = vmatpush1.bf16.msra.mxu0 0
    %968 = vmatprep.subr.bf16.mxu0 0
    %969 = vmatpush1.bf16.msra.mxu0 0
    %970 = vmatprep.subr.bf16.mxu0 0
    %971 = vmatpush1.bf16.msra.mxu0 0
    %972 = vmatprep.subr.bf16.mxu0 0
    %973 = vmatpush1.bf16.msra.mxu0 0
    %974 = vmatprep.subr.bf16.mxu0 0
    %975 = vmatpush1.bf16.msra.mxu0 0
    %976 = vmatprep.subr.bf16.mxu0 0
    %977 = vmatpush1.bf16.msra.mxu0 0
    %978 = vmatprep.subr.bf16.mxu0 0
    %979 = vmatpush1.bf16.msra.mxu0 0
    %980 = vmatprep.subr.bf16.mxu0 0
    %981 = vmatpush1.bf16.msra.mxu0 0
    %982 = vmatprep.subr.bf16.mxu0 0
    %983 = vmatpush1.bf16.msra.mxu0 0
    %984 = vmatprep.subr.bf16.mxu0 0
    %985 = vmatpush1.bf16.msra.mxu0 0
    %986 = vmatprep.mubr.bf16.mxu0 0
    %987 = vmatmul.mubr.bf16.gmra.mrb[0].mxu0 %v952
    %v988 = vpop.f32.mrb[0].mxu0
    %v989 = vadd.f32 %v946, %v988
    %v990 = vpop.f32.mrb[0].mxu0
    %v991 = vpop.f32.mrb[0].mxu0
    %v992 = vadd.f32 %v947, %v991
    %v993 = vpop.f32.mrb[0].mxu0
    %994 = vdwg.mxu0
    %995 = vrot.lane.b32.xlu0 %v944, 96
    %v996 = vpop.permute.xlu0 %995
    %v998 = vmul.f32 %v989, %v996
    %v999 = vmul.f32 %v992, %v996
    %v1000 = vsel %vm71, %v998, 0.0
    %1001 = vadd.xlane.f32.xlu0 %v1000
    %v1002 = vpop.xlane.xlu0 %1001
    %v1003 = vsel %vm71, %v999, 0.0
    %1004 = vadd.xlane.f32.xlu0 %v1003
    %v1005 = vpop.xlane.xlu0 %1004
    %v1006 = vadd.f32 %v1002, %v832
    %v1007 = vadd.f32 %v1005, %v836
    %v1008 = vxor.u32 %v1006, 2147483648
    %v1009 = vxor.u32 %v1007, 2147483648
    %v1010 = vmul.f32 %v1008, 1.442695
    %v1011 = vpow.pop %v1010
    %v1012 = vmul.f32 %v1009, 1.442695
    %v1013 = vpow.pop %v1012
    %v1014 = vadd.f32 %v1011, 1.0
    %v1015 = vadd.f32 %v1013, 1.0
    %v1016 = vrcp.pop %v1014
    %v1017 = vmul.f32 1.0, %v1016
    %v1018 = vrcp.pop %v1015
    %v1019 = vmul.f32 1.0, %v1018
    %1021 = vset.pattern.permute.xlu0 1
    %1022 = vperm.xlu0 %1021, %v1017
    %v1023 = vpop.permute.xlu0 %1022
    %1026 = vset.pattern.permute.xlu0 1
    %1027 = vperm.xlu0 %1026, %v1019
    %v1028 = vpop.permute.xlu0 %1027
    %v1030 = vmul.f32 %v1023, %v830
    %v1031 = vmul.f32 %v1028, %v834
    %v1032 = vsub.f32 1.0, %v1017
    %v1033 = vsub.f32 1.0, %v1019
    %1035 = vset.pattern.permute.xlu0 1
    %1036 = vperm.xlu0 %1035, %v1032
    %v1037 = vpop.permute.xlu0 %1036
    %1040 = vset.pattern.permute.xlu0 1
    %1041 = vperm.xlu0 %1040, %v1033
    %v1042 = vpop.permute.xlu0 %1041
    %v1044 = vmul.f32 %v1037, %v989
    %v1045 = vmul.f32 %v1042, %v992
    %1048 = vrot.lane.b32.xlu0 %v1044, 96
    %v1049 = vpop.permute.xlu0 %1048
    %1050 = vrot.lane.b32.xlu0 %v1045, 96
    %v1051 = vpop.permute.xlu0 %1050
    %v1054 = vadd.f32 %v1030, %v1049
    %v1055 = vadd.f32 %v1031, %v1051
    %s1056 = scalar_lea.vmem %s3, 96
    %v1057 = vld [vmem:[%s1056] sm:$0xff]
    %v1058 = vld [vmem:[%s1056 + $0x8] sm:$0xff]
    %v1059 = vld [vmem:[%s1056 + $0x10] sm:$0xff]
    %v1060 = vld [vmem:[%s1056 + $0x18] sm:$0xff]
    %v1061 = vld [vmem:[%s4 + $0x6] ss:$0 sm:$0xff]
    %v1062 = vpack.c.bf16 %v1055, %v1054
    %1064 = vrot.lane.b32.xlu0 %v1062, 32
    %v1065 = vpop.permute.xlu0 %1064
    %v1070 = vunpack.c.l.b16 %v1057
    %v1071 = vunpack.c.h.b16 %v1057
    %v1072 = vunpack.c.l.b16 %v1058
    %v1073 = vunpack.c.h.b16 %v1058
    %v1074 = vunpack.c.l.b16 %v1059
    %v1075 = vunpack.c.h.b16 %v1059
    %v1076 = vunpack.c.l.b16 %v1060
    %v1077 = vunpack.c.h.b16 %v1060
    %v1078 = vpack.c.b16 %v1072, %v1070
    %v1079 = vpack.c.b16 %v1073, %v1071
    %v1080 = vpack.c.b16 %v1076, %v1074
    %v1081 = vpack.c.b16 %v1077, %v1075
    %v1087 = vsel %vm71, %v1065, 0
    %1089 = vmatprep.subr.bf16.mxu0 %v1079
    %1090 = vmatpush1.bf16.msra.mxu0 %v1078
    %1091 = vmatprep.subr.bf16.mxu0 %v1081
    %1092 = vmatpush1.bf16.msra.mxu0 %v1080
    %1093 = vmatprep.subr.bf16.mxu0 0
    %1094 = vmatpush1.bf16.msra.mxu0 0
    %1095 = vmatprep.subr.bf16.mxu0 0
    %1096 = vmatpush1.bf16.msra.mxu0 0
    %1097 = vmatprep.subr.bf16.mxu0 0
    %1098 = vmatpush1.bf16.msra.mxu0 0
    %1099 = vmatprep.subr.bf16.mxu0 0
    %1100 = vmatpush1.bf16.msra.mxu0 0
    %1101 = vmatprep.subr.bf16.mxu0 0
    %1102 = vmatpush1.bf16.msra.mxu0 0
    %1103 = vmatprep.subr.bf16.mxu0 0
    %1104 = vmatpush1.bf16.msra.mxu0 0
    %1105 = vmatprep.subr.bf16.mxu0 0
    %1106 = vmatpush1.bf16.msra.mxu0 0
    %1107 = vmatprep.subr.bf16.mxu0 0
    %1108 = vmatpush1.bf16.msra.mxu0 0
    %1109 = vmatprep.subr.bf16.mxu0 0
    %1110 = vmatpush1.bf16.msra.mxu0 0
    %1111 = vmatprep.subr.bf16.mxu0 0
    %1112 = vmatpush1.bf16.msra.mxu0 0
    %1113 = vmatprep.subr.bf16.mxu0 0
    %1114 = vmatpush1.bf16.msra.mxu0 0
    %1115 = vmatprep.subr.bf16.mxu0 0
    %1116 = vmatpush1.bf16.msra.mxu0 0
    %1117 = vmatprep.subr.bf16.mxu0 0
    %1118 = vmatpush1.bf16.msra.mxu0 0
    %1119 = vmatprep.subr.bf16.mxu0 0
    %1120 = vmatpush1.bf16.msra.mxu0 0
    %1121 = vmatprep.mubr.bf16.mxu0 0
    %1122 = vmatmul.mubr.bf16.gmra.mrb[0].mxu0 %v1087
    %v1123 = vpop.f32.mrb[0].mxu0
    %v1124 = vadd.f32 0.0, %v1123
    %v1125 = vpop.f32.mrb[0].mxu0
    %v1126 = vpop.f32.mrb[0].mxu0
    %v1127 = vadd.f32 0.0, %v1126
    %v1128 = vpop.f32.mrb[0].mxu0
    %1129 = vdwg.mxu0
    %v1130 = vadd.f32 %v1124, %v1061
    %v1131 = vadd.f32 %v1127, %v1061
    %vm1132 = vcmask 64512
    %1133 = vst.msk [vmem:[#allocation2] sm:$0xff] %vm1132, %v22
    %1134 = vst.msk [vmem:[#allocation2 + $0x8] sm:$0xff] %vm1132, %v23
    %1137 = vrot.lane.b32.xlu0 %v1130, 8
    %v1138 = vpop.permute.xlu0 %1137
    %1139 = vrot.lane.b32.xlu0 %v1131, 8
    %v1140 = vpop.permute.xlu0 %1139
    %vm1143 = vcmask 130112
    %1144 = vst.msk [vmem:[#allocation2] sm:$0xff] %vm1143, %v1138
    %1145 = vst.msk [vmem:[#allocation2 + $0x8] sm:$0xff] %vm1143, %v1140
    // Predicated region
    $region22: #{gtn_forward.1} parent=1 // pred_check
      _
    $region23: #{gtn_forward.1} parent=1 // pred_check_branch
      %1147 = sbr.rel (0) target = $region25
    $region24: #{gtn_forward.1} parent=1 // pred_region
      %s1149 = ssub.s32 256, 256
      %1150 = vsyncadd [#allocation3], %s1149
      %s1151 = sshll.u32 [#allocation2], 4
      %s1152 = int_to_ptr.vmem [resolvable:$true] %s1151
      %1157 = dma.vmem_to_hbm [thread:$0]  %s1152, 256, %s5, [#allocation3], 128, 128, 8
    $region25: #{gtn_forward.1} parent=1 // pred_fallthru
      _
    // Predicated region
    $region26: #{gtn_forward.1} parent=1 // pred_check
      _
    $region27: #{gtn_forward.1} parent=1 // pred_check_branch
      %1159 = sbr.rel (0) target = $region29
    $region28: #{gtn_forward.1} parent=1 // pred_region
      %1160 = dma.done [#allocation3], 256
    $region29: #{gtn_forward.1} parent=1 // pred_fallthru
      _
    %1161 = vsyncpa [#allocation3], 1

</llo_original>
